<compile_context>
chip_gen: v6e
topology: v6e:2x2x1
jax: 0.10.0
libtpu: 0.0.40
codegen_flags: <defaults>
</compile_context>

<pallas_src>
import math

import jax
import jax.numpy as jnp
from jax.experimental import pallas as pl
from jax.experimental.pallas import tpu as pltpu

LN_EPS = 1e-5      # torch.nn.LayerNorm default eps
ATT_EPS = 1e-9     # Attention eps (folds to exactly 1.0 in f32)


def _layernorm(z, g, b):
    mu = jnp.mean(z, axis=-1, keepdims=True)
    var = jnp.mean((z - mu) ** 2, axis=-1, keepdims=True)   # biased var (PyTorch LN)
    return (z - mu) * jax.lax.rsqrt(var + LN_EPS) * g + b


def transformer_block_kernel(x_ref, wv_ref, wo_ref, w1_ref, w2_ref,
                             lnd_ref, lnh_ref, o_ref):
    """One grid step processes a (BT, N, D) tile of batch elements."""
    BT, N, D = x_ref.shape

    # Packed LayerNorm params: lnd rows = [g1, b1, gf2, bf2, g2, b2, 0, 0],
    # lnh rows = [gf1, bf1, 0, ...].
    lnd = lnd_ref[...]
    lnh = lnh_ref[...]
    g1, b1 = lnd[0:1], lnd[1:2]
    gf2, bf2 = lnd[2:3], lnd[3:4]
    g2, b2 = lnd[4:5], lnd[5:6]
    gf1, bf1 = lnh[0:1], lnh[1:2]

    # Per-batch column-sum of x over the sequence axis (the only op that
    # touches all N rows of the input).
    xs = jnp.sum(x_ref[...], axis=1)                                    # (BT, D)

    # Degenerate attention: colsum(x) @ Wv^T @ Wo^T.
    # (1 + ATT_EPS) factor omitted: 1 + 1e-9 rounds to exactly 1.0 in f32.
    v = jnp.dot(xs, wv_ref[...], preferred_element_type=jnp.float32)    # (BT, D)
    attn = jnp.dot(v, wo_ref[...], preferred_element_type=jnp.float32)  # (BT, D)

    # x = x + bn1(x)   (residual with LayerNorm of the attention output)
    x1 = attn + _layernorm(attn, g1, b1)                                # (BT, D)

    # feedforward: LBRNN x 2  (Linear -> LayerNorm -> ReLU)
    h = jnp.dot(x1, w1_ref[...], preferred_element_type=jnp.float32)    # (BT, H)
    h = jnp.maximum(_layernorm(h, gf1, bf1), 0.0)
    f = jnp.dot(h, w2_ref[...], preferred_element_type=jnp.float32)     # (BT, D)
    f = jnp.maximum(_layernorm(f, gf2, bf2), 0.0)

    # x = x + bn2(x); broadcast the per-batch row over the sequence axis.
    out_row = f + _layernorm(f, g2, b2)                                 # (BT, D)

    if o_ref.ndim == 2:
        # Lane-dense flat output block (BT, N*D): one unmasked full-width store.
        o_ref[...] = jnp.concatenate([out_row] * N, axis=-1)
    else:
        o_ref[...] = jnp.broadcast_to(out_row[:, None, :], (BT, N, D))


def _pick_tile(B, N, D, H, vmem_limit):
    """Pick the batch-tile height `bt` and whether the output can be flat.

    Budget: x block + out block (each double-buffered, f32) against ~60% of
    the requested VMEM limit, minus the (worst-case double-buffered) resident
    weights / LayerNorm packs.
    """
    per_row = 2 * 2 * (N * D * 4)                                   # in+out, x2 buffers
    weight_bytes = 2 * 4 * (2 * D * D + 2 * D * H + 8 * D + 8 * H)
    budget = int(0.6 * vmem_limit) - weight_bytes
    cap = max(budget // per_row, 1)
    cap = min(cap, B)

    divisors = [d for d in range(1, B + 1) if B % d == 0]
    aligned = [d for d in divisors if d % 8 == 0 and d <= cap]
    # Prefer a sublane-aligned tile that leaves grid >= 2 (v7x megacore);
    # fall back to grid == 1 only if that is the sole aligned choice.
    for need_grid2 in (True, False):
        cands = [d for d in aligned if (not need_grid2) or (B // d >= 2)]
        if cands:
            return max(cands), True          # flat, lane-dense output layout
    if B == 1:
        return 1, True                       # block covers full B -> flat is safe
    # Tiny / awkward B: keep grid >= 2 for v7x; bt is not sublane-aligned so
    # use the (always safe) 3-D output layout.
    cap2 = max(min(cap, B // 2), 1)
    bt = max(d for d in divisors if d <= cap2)
    return bt, False


def transformer_block(x, params, num_heads):
    B, N, D = x.shape
    assert num_heads == 1, "reference module only type-checks with num_heads == 1"
    H = params["w1"].shape[0]

    # Pre-transpose weights once (in, out) so there is no in-kernel .T.
    wv_t = params["wv"].T            # (D, D)
    wo_t = params["wo"].T            # (D, D)
    w1_t = params["w1"].T            # (D, H)
    w2_t = params["w2"].T            # (H, D)

    # Pack the LayerNorm vectors host-side: 2 refs instead of 10.
    lnd = jnp.concatenate(
        [params["g1"], params["b1"], params["gf2"], params["bf2"],
         params["g2"], params["b2"], jnp.zeros((2, D), jnp.float32)], axis=0)  # (8, D)
    lnh = jnp.concatenate(
        [params["gf1"], params["bf1"], jnp.zeros((6, H), jnp.float32)], axis=0)  # (8, H)

    # Per-generation VMEM capacity -> explicit scoped limit (~75% of physical,
    # capped at 100 MiB): ~96 MiB on v5e/v6e (128 MiB), ~48 MiB on v7x (64 MiB).
    try:
        vmem_phys = int(pltpu.get_tpu_info().vmem_capacity_bytes)
    except Exception:
        vmem_phys = 64 << 20
    vmem_limit = min(int(vmem_phys * 0.75), 100 << 20)

    bt, flat_out = _pick_tile(B, N, D, H, vmem_limit)
    grid = (B // bt,)

    def run(single_buffer_weights):
        # Loop-invariant weights: single-buffer if the API supports it.
        if single_buffer_weights and hasattr(pl, "Buffered"):
            wkw = {"pipeline_mode": pl.Buffered(1)}
        else:
            wkw = {}

        def wspec(shape):
            return pl.BlockSpec(shape, lambda i: (0, 0), **wkw)

        in_specs = [
            pl.BlockSpec((bt, N, D), lambda i: (i, 0, 0)),   # x (contiguous DMA)
            wspec((D, D)), wspec((D, D)),                    # Wv^T, Wo^T
            wspec((D, H)), wspec((H, D)),                    # W1^T, W2^T
            wspec((8, D)), wspec((8, H)),                    # packed LN params
        ]
        if flat_out:
            out_shape = jax.ShapeDtypeStruct((B, N * D), jnp.float32)
            out_spec = pl.BlockSpec((bt, N * D), lambda i: (i, 0))
        else:
            out_shape = jax.ShapeDtypeStruct((B, N, D), jnp.float32)
            out_spec = pl.BlockSpec((bt, N, D), lambda i: (i, 0, 0))

        out = pl.pallas_call(
            transformer_block_kernel,
            out_shape=out_shape,
            grid=grid,
            in_specs=in_specs,
            out_specs=out_spec,
            compiler_params=pltpu.CompilerParams(
                dimension_semantics=("parallel",),
                vmem_limit_bytes=vmem_limit),
        )(x, wv_t, wo_t, w1_t, w2_t, lnd, lnh)
        return jax.block_until_ready(out)

    try:
        out = run(True)
    except Exception:
        # Fallback if pl.Buffered(1)/pipeline_mode is unsupported in this jax.
        out = run(False)

    return out.reshape(B, N, D) if flat_out else out


# ---------------- pure-JAX reference (full-fidelity, for verification) ----------------
def reference(x, params, num_heads):
    B, N, D = x.shape
    hd = D // num_heads
    q = x @ params["wq"].T
    k = x @ params["wk"].T
    v = x @ params["wv"].T
    s = (q @ jnp.swapaxes(k, -1, -2)) / math.sqrt(hd)
    p = jax.nn.softmax(s, axis=-1)
    w = p / p + ATT_EPS                      # single head: sum over head axis == p
    a = (w @ v) @ params["wo"].T

    def ln(z, g, b):
        mu = jnp.mean(z, -1, keepdims=True)
        var = jnp.mean((z - mu) ** 2, -1, keepdims=True)
        return (z - mu) / jnp.sqrt(var + LN_EPS) * g + b

    x1 = a + ln(a, params["g1"], params["b1"])
    h = jnp.maximum(ln(x1 @ params["w1"].T, params["gf1"], params["bf1"]), 0.0)
    f = jnp.maximum(ln(h @ params["w2"].T, params["gf2"], params["bf2"]), 0.0)
    return f + ln(f, params["g2"], params["b2"])


def make_params(key, embed_dim, num_heads, out_dims):
    head_dim = embed_dim // num_heads
    hidden = embed_dim * out_dims

    def kaiming(k, out_f, in_f):
        return jax.random.normal(k, (out_f, in_f), jnp.float32) * math.sqrt(2.0 / in_f)

    ks = jax.random.split(key, 6)
    return {
        "wq": kaiming(ks[0], head_dim, head_dim),
        "wk": kaiming(ks[1], head_dim, head_dim),
        "wv": kaiming(ks[2], head_dim, head_dim),
        "wo": kaiming(ks[3], embed_dim, head_dim * num_heads),
        "g1": jnp.ones((1, embed_dim), jnp.float32),
        "b1": jnp.zeros((1, embed_dim), jnp.float32),
        "w1": kaiming(ks[4], hidden, embed_dim),
        "gf1": jnp.ones((1, hidden), jnp.float32),
        "bf1": jnp.zeros((1, hidden), jnp.float32),
        "w2": kaiming(ks[5], embed_dim, hidden),
        "gf2": jnp.ones((1, embed_dim), jnp.float32),
        "bf2": jnp.zeros((1, embed_dim), jnp.float32),
        "g2": jnp.ones((1, embed_dim), jnp.float32),
        "b2": jnp.zeros((1, embed_dim), jnp.float32),
    }


if __name__ == "__main__":
    embed_dim, num_heads, out_dims = 32, 1, 2   # num_heads=1 required by reference
    N = 8

    key = jax.random.PRNGKey(0)
    kx, kp, kx2 = jax.random.split(key, 3)
    params = make_params(kp, embed_dim, num_heads, out_dims)

    # Case 1: tiny batch -> exercises the grid>=2 fallback path (3-D out block).
    x = jax.random.normal(kx, (2, N, embed_dim), jnp.float32)
    out = transformer_block(x, params, num_heads)
    ref = reference(x, params, num_heads)
    assert jnp.allclose(out, ref, rtol=1e-4, atol=1e-4), "mismatch (B=2) vs reference"

    # Case 2: B=16 -> exercises the sublane-aligned, lane-dense flat-output path.
    x2 = jax.random.normal(kx2, (16, N, embed_dim), jnp.float32)
    out2 = transformer_block(x2, params, num_heads)
    ref2 = reference(x2, params, num_heads)
    assert jnp.allclose(out2, ref2, rtol=1e-4, atol=1e-4), "mismatch (B=16) vs reference"

    print("KERNEL_OK")
</pallas_src>

<mosaic_0001>
module attributes {stable_mosaic.version = 11 : i64} {
  func.func @transformer_block_kernel(%arg0: i32, %arg1: memref<1x8x32xf32, #tpu.memory_space<vmem>>, %arg2: memref<32x32xf32, #tpu.memory_space<vmem>>, %arg3: memref<32x32xf32, #tpu.memory_space<vmem>>, %arg4: memref<32x64xf32, #tpu.memory_space<vmem>>, %arg5: memref<64x32xf32, #tpu.memory_space<vmem>>, %arg6: memref<8x32xf32, #tpu.memory_space<vmem>>, %arg7: memref<8x64xf32, #tpu.memory_space<vmem>>, %arg8: memref<1x8x32xf32, #tpu.memory_space<vmem>>) attributes {dimension_semantics = [#tpu.dimension_semantics<parallel>], iteration_bounds = array<i64: 2>, scalar_prefetch = 0 : i64, scratch_operands = 0 : i64, tpu.core_type = #tpu.core_type<tc>, window_params = [{transform_indices = @transform_0, window_bounds = array<i64: 1, 8, 32>}, {pipeline_mode = #tpu.pipeline_mode<synchronous>, transform_indices = @transform_1, window_bounds = array<i64: 32, 32>}, {pipeline_mode = #tpu.pipeline_mode<synchronous>, transform_indices = @transform_2, window_bounds = array<i64: 32, 32>}, {pipeline_mode = #tpu.pipeline_mode<synchronous>, transform_indices = @transform_3, window_bounds = array<i64: 32, 64>}, {pipeline_mode = #tpu.pipeline_mode<synchronous>, transform_indices = @transform_4, window_bounds = array<i64: 64, 32>}, {pipeline_mode = #tpu.pipeline_mode<synchronous>, transform_indices = @transform_5, window_bounds = array<i64: 8, 32>}, {pipeline_mode = #tpu.pipeline_mode<synchronous>, transform_indices = @transform_6, window_bounds = array<i64: 8, 64>}, {transform_indices = @transform_7, window_bounds = array<i64: 1, 8, 32>}]} {
    %c0 = arith.constant 0 : index
    %c0_0 = arith.constant 0 : index
    %0 = vector.load %arg6[%c0, %c0_0] : memref<8x32xf32, #tpu.memory_space<vmem>>, vector<8x32xf32>
    %c0_1 = arith.constant 0 : index
    %c0_2 = arith.constant 0 : index
    %1 = vector.load %arg7[%c0_1, %c0_2] : memref<8x64xf32, #tpu.memory_space<vmem>>, vector<8x64xf32>
    %2 = vector.extract_strided_slice %0 {offsets = [0, 0], sizes = [1, 32], strides = [1, 1]} : vector<8x32xf32> to vector<1x32xf32>
    %3 = vector.extract_strided_slice %0 {offsets = [1, 0], sizes = [1, 32], strides = [1, 1]} : vector<8x32xf32> to vector<1x32xf32>
    %4 = vector.extract_strided_slice %0 {offsets = [2, 0], sizes = [1, 32], strides = [1, 1]} : vector<8x32xf32> to vector<1x32xf32>
    %5 = vector.extract_strided_slice %0 {offsets = [3, 0], sizes = [1, 32], strides = [1, 1]} : vector<8x32xf32> to vector<1x32xf32>
    %6 = vector.extract_strided_slice %0 {offsets = [4, 0], sizes = [1, 32], strides = [1, 1]} : vector<8x32xf32> to vector<1x32xf32>
    %7 = vector.extract_strided_slice %0 {offsets = [5, 0], sizes = [1, 32], strides = [1, 1]} : vector<8x32xf32> to vector<1x32xf32>
    %8 = vector.extract_strided_slice %1 {offsets = [0, 0], sizes = [1, 64], strides = [1, 1]} : vector<8x64xf32> to vector<1x64xf32>
    %9 = vector.extract_strided_slice %1 {offsets = [1, 0], sizes = [1, 64], strides = [1, 1]} : vector<8x64xf32> to vector<1x64xf32>
    %c0_3 = arith.constant 0 : index
    %c0_4 = arith.constant 0 : index
    %c0_5 = arith.constant 0 : index
    %10 = vector.load %arg1[%c0_3, %c0_4, %c0_5] : memref<1x8x32xf32, #tpu.memory_space<vmem>>, vector<1x8x32xf32>
    %cst = arith.constant dense<0.000000e+00> : vector<1x32xf32>
    %11 = vector.multi_reduction <add>, %10, %cst [1] : vector<1x8x32xf32> to vector<1x32xf32>
    %c0_6 = arith.constant 0 : index
    %c0_7 = arith.constant 0 : index
    %12 = vector.load %arg2[%c0_6, %c0_7] : memref<32x32xf32, #tpu.memory_space<vmem>>, vector<32x32xf32>
    %cst_8 = arith.constant dense<0.000000e+00> : vector<1x32xf32>
    %13 = tpu.matmul %11, %12, %cst_8 {dimension_numbers = #tpu.dot_dimension_numbers<[1], [0], [0], [1], [0, 0, 1, 1], [], []>} : vector<1x32xf32>, vector<32x32xf32>, vector<1x32xf32> -> vector<1x32xf32>
    %c0_9 = arith.constant 0 : index
    %c0_10 = arith.constant 0 : index
    %14 = vector.load %arg3[%c0_9, %c0_10] : memref<32x32xf32, #tpu.memory_space<vmem>>, vector<32x32xf32>
    %cst_11 = arith.constant dense<0.000000e+00> : vector<1x32xf32>
    %15 = tpu.matmul %13, %14, %cst_11 {dimension_numbers = #tpu.dot_dimension_numbers<[1], [0], [0], [1], [0, 0, 1, 1], [], []>} : vector<1x32xf32>, vector<32x32xf32>, vector<1x32xf32> -> vector<1x32xf32>
    %cst_12 = arith.constant dense<0.000000e+00> : vector<1xf32>
    %16 = vector.multi_reduction <add>, %15, %cst_12 [1] : vector<1x32xf32> to vector<1xf32>
    %17 = vector.shape_cast %16 : vector<1xf32> to vector<1x1xf32>
    %cst_13 = arith.constant 3.200000e+01 : f32
    %18 = vector.broadcast %cst_13 : f32 to vector<1x1xf32>
    %19 = arith.divf %17, %18 : vector<1x1xf32>
    %20 = vector.broadcast %19 : vector<1x1xf32> to vector<1x32xf32>
    %21 = arith.subf %15, %20 : vector<1x32xf32>
    %22 = arith.mulf %21, %21 : vector<1x32xf32>
    %cst_14 = arith.constant dense<0.000000e+00> : vector<1xf32>
    %23 = vector.multi_reduction <add>, %22, %cst_14 [1] : vector<1x32xf32> to vector<1xf32>
    %24 = vector.shape_cast %23 : vector<1xf32> to vector<1x1xf32>
    %cst_15 = arith.constant 3.200000e+01 : f32
    %25 = vector.broadcast %cst_15 : f32 to vector<1x1xf32>
    %26 = arith.divf %24, %25 : vector<1x1xf32>
    %27 = vector.broadcast %19 : vector<1x1xf32> to vector<1x32xf32>
    %28 = arith.subf %15, %27 : vector<1x32xf32>
    %cst_16 = arith.constant 9.99999974E-6 : f32
    %29 = vector.broadcast %cst_16 : f32 to vector<1x1xf32>
    %30 = arith.addf %26, %29 : vector<1x1xf32>
    %31 = math.rsqrt %30 : vector<1x1xf32>
    %32 = vector.broadcast %31 : vector<1x1xf32> to vector<1x32xf32>
    %33 = arith.mulf %28, %32 : vector<1x32xf32>
    %34 = arith.mulf %33, %2 : vector<1x32xf32>
    %35 = arith.addf %34, %3 : vector<1x32xf32>
    %36 = arith.addf %15, %35 : vector<1x32xf32>
    %c0_17 = arith.constant 0 : index
    %c0_18 = arith.constant 0 : index
    %37 = vector.load %arg4[%c0_17, %c0_18] : memref<32x64xf32, #tpu.memory_space<vmem>>, vector<32x64xf32>
    %cst_19 = arith.constant dense<0.000000e+00> : vector<1x64xf32>
    %38 = tpu.matmul %36, %37, %cst_19 {dimension_numbers = #tpu.dot_dimension_numbers<[1], [0], [0], [1], [0, 0, 1, 1], [], []>} : vector<1x32xf32>, vector<32x64xf32>, vector<1x64xf32> -> vector<1x64xf32>
    %cst_20 = arith.constant dense<0.000000e+00> : vector<1xf32>
    %39 = vector.multi_reduction <add>, %38, %cst_20 [1] : vector<1x64xf32> to vector<1xf32>
    %40 = vector.shape_cast %39 : vector<1xf32> to vector<1x1xf32>
    %cst_21 = arith.constant 6.400000e+01 : f32
    %41 = vector.broadcast %cst_21 : f32 to vector<1x1xf32>
    %42 = arith.divf %40, %41 : vector<1x1xf32>
    %43 = vector.broadcast %42 : vector<1x1xf32> to vector<1x64xf32>
    %44 = arith.subf %38, %43 : vector<1x64xf32>
    %45 = arith.mulf %44, %44 : vector<1x64xf32>
    %cst_22 = arith.constant dense<0.000000e+00> : vector<1xf32>
    %46 = vector.multi_reduction <add>, %45, %cst_22 [1] : vector<1x64xf32> to vector<1xf32>
    %47 = vector.shape_cast %46 : vector<1xf32> to vector<1x1xf32>
    %cst_23 = arith.constant 6.400000e+01 : f32
    %48 = vector.broadcast %cst_23 : f32 to vector<1x1xf32>
    %49 = arith.divf %47, %48 : vector<1x1xf32>
    %50 = vector.broadcast %42 : vector<1x1xf32> to vector<1x64xf32>
    %51 = arith.subf %38, %50 : vector<1x64xf32>
    %cst_24 = arith.constant 9.99999974E-6 : f32
    %52 = vector.broadcast %cst_24 : f32 to vector<1x1xf32>
    %53 = arith.addf %49, %52 : vector<1x1xf32>
    %54 = math.rsqrt %53 : vector<1x1xf32>
    %55 = vector.broadcast %54 : vector<1x1xf32> to vector<1x64xf32>
    %56 = arith.mulf %51, %55 : vector<1x64xf32>
    %57 = arith.mulf %56, %8 : vector<1x64xf32>
    %58 = arith.addf %57, %9 : vector<1x64xf32>
    %cst_25 = arith.constant 0.000000e+00 : f32
    %59 = vector.broadcast %cst_25 : f32 to vector<1x64xf32>
    %60 = arith.maximumf %58, %59 : vector<1x64xf32>
    %c0_26 = arith.constant 0 : index
    %c0_27 = arith.constant 0 : index
    %61 = vector.load %arg5[%c0_26, %c0_27] : memref<64x32xf32, #tpu.memory_space<vmem>>, vector<64x32xf32>
    %cst_28 = arith.constant dense<0.000000e+00> : vector<1x32xf32>
    %62 = tpu.matmul %60, %61, %cst_28 {dimension_numbers = #tpu.dot_dimension_numbers<[1], [0], [0], [1], [0, 0, 1, 1], [], []>} : vector<1x64xf32>, vector<64x32xf32>, vector<1x32xf32> -> vector<1x32xf32>
    %cst_29 = arith.constant dense<0.000000e+00> : vector<1xf32>
    %63 = vector.multi_reduction <add>, %62, %cst_29 [1] : vector<1x32xf32> to vector<1xf32>
    %64 = vector.shape_cast %63 : vector<1xf32> to vector<1x1xf32>
    %cst_30 = arith.constant 3.200000e+01 : f32
    %65 = vector.broadcast %cst_30 : f32 to vector<1x1xf32>
    %66 = arith.divf %64, %65 : vector<1x1xf32>
    %67 = vector.broadcast %66 : vector<1x1xf32> to vector<1x32xf32>
    %68 = arith.subf %62, %67 : vector<1x32xf32>
    %69 = arith.mulf %68, %68 : vector<1x32xf32>
    %cst_31 = arith.constant dense<0.000000e+00> : vector<1xf32>
    %70 = vector.multi_reduction <add>, %69, %cst_31 [1] : vector<1x32xf32> to vector<1xf32>
    %71 = vector.shape_cast %70 : vector<1xf32> to vector<1x1xf32>
    %cst_32 = arith.constant 3.200000e+01 : f32
    %72 = vector.broadcast %cst_32 : f32 to vector<1x1xf32>
    %73 = arith.divf %71, %72 : vector<1x1xf32>
    %74 = vector.broadcast %66 : vector<1x1xf32> to vector<1x32xf32>
    %75 = arith.subf %62, %74 : vector<1x32xf32>
    %cst_33 = arith.constant 9.99999974E-6 : f32
    %76 = vector.broadcast %cst_33 : f32 to vector<1x1xf32>
    %77 = arith.addf %73, %76 : vector<1x1xf32>
    %78 = math.rsqrt %77 : vector<1x1xf32>
    %79 = vector.broadcast %78 : vector<1x1xf32> to vector<1x32xf32>
    %80 = arith.mulf %75, %79 : vector<1x32xf32>
    %81 = arith.mulf %80, %4 : vector<1x32xf32>
    %82 = arith.addf %81, %5 : vector<1x32xf32>
    %cst_34 = arith.constant 0.000000e+00 : f32
    %83 = vector.broadcast %cst_34 : f32 to vector<1x32xf32>
    %84 = arith.maximumf %82, %83 : vector<1x32xf32>
    %cst_35 = arith.constant dense<0.000000e+00> : vector<1xf32>
    %85 = vector.multi_reduction <add>, %84, %cst_35 [1] : vector<1x32xf32> to vector<1xf32>
    %86 = vector.shape_cast %85 : vector<1xf32> to vector<1x1xf32>
    %cst_36 = arith.constant 3.200000e+01 : f32
    %87 = vector.broadcast %cst_36 : f32 to vector<1x1xf32>
    %88 = arith.divf %86, %87 : vector<1x1xf32>
    %89 = vector.broadcast %88 : vector<1x1xf32> to vector<1x32xf32>
    %90 = arith.subf %84, %89 : vector<1x32xf32>
    %91 = arith.mulf %90, %90 : vector<1x32xf32>
    %cst_37 = arith.constant dense<0.000000e+00> : vector<1xf32>
    %92 = vector.multi_reduction <add>, %91, %cst_37 [1] : vector<1x32xf32> to vector<1xf32>
    %93 = vector.shape_cast %92 : vector<1xf32> to vector<1x1xf32>
    %cst_38 = arith.constant 3.200000e+01 : f32
    %94 = vector.broadcast %cst_38 : f32 to vector<1x1xf32>
    %95 = arith.divf %93, %94 : vector<1x1xf32>
    %96 = vector.broadcast %88 : vector<1x1xf32> to vector<1x32xf32>
    %97 = arith.subf %84, %96 : vector<1x32xf32>
    %cst_39 = arith.constant 9.99999974E-6 : f32
    %98 = vector.broadcast %cst_39 : f32 to vector<1x1xf32>
    %99 = arith.addf %95, %98 : vector<1x1xf32>
    %100 = math.rsqrt %99 : vector<1x1xf32>
    %101 = vector.broadcast %100 : vector<1x1xf32> to vector<1x32xf32>
    %102 = arith.mulf %97, %101 : vector<1x32xf32>
    %103 = arith.mulf %102, %6 : vector<1x32xf32>
    %104 = arith.addf %103, %7 : vector<1x32xf32>
    %105 = arith.addf %84, %104 : vector<1x32xf32>
    %106 = vector.shape_cast %105 : vector<1x32xf32> to vector<1x1x32xf32>
    %107 = vector.shape_cast %106 : vector<1x1x32xf32> to vector<1x1x32xf32>
    %108 = vector.broadcast %107 : vector<1x1x32xf32> to vector<1x8x32xf32>
    %c0_40 = arith.constant 0 : index
    %c0_41 = arith.constant 0 : index
    %c0_42 = arith.constant 0 : index
    %109 = vector.load %arg8[%c0_40, %c0_41, %c0_42] : memref<1x8x32xf32, #tpu.memory_space<vmem>>, vector<1x8x32xf32>
    tpu.vector_store %arg8[%c0_40, %c0_41, %c0_42], %108 {strides = array<i32>} : memref<1x8x32xf32, #tpu.memory_space<vmem>>, vector<1x8x32xf32>,
    return
  }
  func.func @transform_0(%arg0: i32) -> (i32, i32, i32) {
    %c0_i32 = arith.constant 0 : i32
    %c0_i32_0 = arith.constant 0 : i32
    %c0_i32_1 = arith.constant 0 : i32
    return %arg0, %c0_i32, %c0_i32_0 : i32, i32, i32
  }
  func.func @transform_1(%arg0: i32) -> (i32, i32) {
    %c0_i32 = arith.constant 0 : i32
    %c0_i32_0 = arith.constant 0 : i32
    %c0_i32_1 = arith.constant 0 : i32
    return %c0_i32, %c0_i32_0 : i32, i32
  }
  func.func @transform_2(%arg0: i32) -> (i32, i32) {
    %c0_i32 = arith.constant 0 : i32
    %c0_i32_0 = arith.constant 0 : i32
    %c0_i32_1 = arith.constant 0 : i32
    return %c0_i32, %c0_i32_0 : i32, i32
  }
  func.func @transform_3(%arg0: i32) -> (i32, i32) {
    %c0_i32 = arith.constant 0 : i32
    %c0_i32_0 = arith.constant 0 : i32
    %c0_i32_1 = arith.constant 0 : i32
    return %c0_i32, %c0_i32_0 : i32, i32
  }
  func.func @transform_4(%arg0: i32) -> (i32, i32) {
    %c0_i32 = arith.constant 0 : i32
    %c0_i32_0 = arith.constant 0 : i32
    %c0_i32_1 = arith.constant 0 : i32
    return %c0_i32, %c0_i32_0 : i32, i32
  }
  func.func @transform_5(%arg0: i32) -> (i32, i32) {
    %c0_i32 = arith.constant 0 : i32
    %c0_i32_0 = arith.constant 0 : i32
    %c0_i32_1 = arith.constant 0 : i32
    return %c0_i32, %c0_i32_0 : i32, i32
  }
  func.func @transform_6(%arg0: i32) -> (i32, i32) {
    %c0_i32 = arith.constant 0 : i32
    %c0_i32_0 = arith.constant 0 : i32
    %c0_i32_1 = arith.constant 0 : i32
    return %c0_i32, %c0_i32_0 : i32, i32
  }
  func.func @transform_7(%arg0: i32) -> (i32, i32, i32) {
    %c0_i32 = arith.constant 0 : i32
    %c0_i32_0 = arith.constant 0 : i32
    %c0_i32_1 = arith.constant 0 : i32
    return %arg0, %c0_i32, %c0_i32_0 : i32, i32, i32
  }
}

module attributes {stable_mosaic.version = 11 : i64} {
  func.func @transformer_block_kernel(%arg0: i32, %arg1: memref<1x8x32xf32, #tpu.memory_space<vmem>>, %arg2: memref<32x32xf32, #tpu.memory_space<vmem>>, %arg3: memref<32x32xf32, #tpu.memory_space<vmem>>, %arg4: memref<32x64xf32, #tpu.memory_space<vmem>>, %arg5: memref<64x32xf32, #tpu.memory_space<vmem>>, %arg6: memref<8x32xf32, #tpu.memory_space<vmem>>, %arg7: memref<8x64xf32, #tpu.memory_space<vmem>>, %arg8: memref<1x8x32xf32, #tpu.memory_space<vmem>>) attributes {dimension_semantics = [#tpu.dimension_semantics<parallel>], iteration_bounds = array<i64: 2>, scalar_prefetch = 0 : i64, scratch_operands = 0 : i64, tpu.core_type = #tpu.core_type<tc>, window_params = [{transform_indices = @transform_0, window_bounds = array<i64: 1, 8, 32>}, {pipeline_mode = #tpu.pipeline_mode<synchronous>, transform_indices = @transform_1, window_bounds = array<i64: 32, 32>}, {pipeline_mode = #tpu.pipeline_mode<synchronous>, transform_indices = @transform_2, window_bounds = array<i64: 32, 32>}, {pipeline_mode = #tpu.pipeline_mode<synchronous>, transform_indices = @transform_3, window_bounds = array<i64: 32, 64>}, {pipeline_mode = #tpu.pipeline_mode<synchronous>, transform_indices = @transform_4, window_bounds = array<i64: 64, 32>}, {pipeline_mode = #tpu.pipeline_mode<synchronous>, transform_indices = @transform_5, window_bounds = array<i64: 8, 32>}, {pipeline_mode = #tpu.pipeline_mode<synchronous>, transform_indices = @transform_6, window_bounds = array<i64: 8, 64>}, {transform_indices = @transform_7, window_bounds = array<i64: 1, 8, 32>}]} {
    %c0 = arith.constant 0 : index
    %c0_0 = arith.constant 0 : index
    %0 = vector.load %arg6[%c0, %c0_0] : memref<8x32xf32, #tpu.memory_space<vmem>>, vector<8x32xf32>
    %c0_1 = arith.constant 0 : index
    %c0_2 = arith.constant 0 : index
    %1 = vector.load %arg7[%c0_1, %c0_2] : memref<8x64xf32, #tpu.memory_space<vmem>>, vector<8x64xf32>
    %2 = vector.extract_strided_slice %0 {offsets = [0, 0], sizes = [1, 32], strides = [1, 1]} : vector<8x32xf32> to vector<1x32xf32>
    %3 = vector.extract_strided_slice %0 {offsets = [1, 0], sizes = [1, 32], strides = [1, 1]} : vector<8x32xf32> to vector<1x32xf32>
    %4 = vector.extract_strided_slice %0 {offsets = [2, 0], sizes = [1, 32], strides = [1, 1]} : vector<8x32xf32> to vector<1x32xf32>
    %5 = vector.extract_strided_slice %0 {offsets = [3, 0], sizes = [1, 32], strides = [1, 1]} : vector<8x32xf32> to vector<1x32xf32>
    %6 = vector.extract_strided_slice %0 {offsets = [4, 0], sizes = [1, 32], strides = [1, 1]} : vector<8x32xf32> to vector<1x32xf32>
    %7 = vector.extract_strided_slice %0 {offsets = [5, 0], sizes = [1, 32], strides = [1, 1]} : vector<8x32xf32> to vector<1x32xf32>
    %8 = vector.extract_strided_slice %1 {offsets = [0, 0], sizes = [1, 64], strides = [1, 1]} : vector<8x64xf32> to vector<1x64xf32>
    %9 = vector.extract_strided_slice %1 {offsets = [1, 0], sizes = [1, 64], strides = [1, 1]} : vector<8x64xf32> to vector<1x64xf32>
    %c0_3 = arith.constant 0 : index
    %c0_4 = arith.constant 0 : index
    %c0_5 = arith.constant 0 : index
    %10 = vector.load %arg1[%c0_3, %c0_4, %c0_5] : memref<1x8x32xf32, #tpu.memory_space<vmem>>, vector<1x8x32xf32>
    %cst = arith.constant dense<0.000000e+00> : vector<1x32xf32>
    %11 = vector.multi_reduction <add>, %10, %cst [1] : vector<1x8x32xf32> to vector<1x32xf32>
    %c0_6 = arith.constant 0 : index
    %c0_7 = arith.constant 0 : index
    %12 = vector.load %arg2[%c0_6, %c0_7] : memref<32x32xf32, #tpu.memory_space<vmem>>, vector<32x32xf32>
    %cst_8 = arith.constant dense<0.000000e+00> : vector<1x32xf32>
    %13 = tpu.matmul %11, %12, %cst_8 {dimension_numbers = #tpu.dot_dimension_numbers<[1], [0], [0], [1], [0, 0, 1, 1], [], []>} : vector<1x32xf32>, vector<32x32xf32>, vector<1x32xf32> -> vector<1x32xf32>
    %c0_9 = arith.constant 0 : index
    %c0_10 = arith.constant 0 : index
    %14 = vector.load %arg3[%c0_9, %c0_10] : memref<32x32xf32, #tpu.memory_space<vmem>>, vector<32x32xf32>
    %cst_11 = arith.constant dense<0.000000e+00> : vector<1x32xf32>
    %15 = tpu.matmul %13, %14, %cst_11 {dimension_numbers = #tpu.dot_dimension_numbers<[1], [0], [0], [1], [0, 0, 1, 1], [], []>} : vector<1x32xf32>, vector<32x32xf32>, vector<1x32xf32> -> vector<1x32xf32>
    %cst_12 = arith.constant dense<0.000000e+00> : vector<1xf32>
    %16 = vector.multi_reduction <add>, %15, %cst_12 [1] : vector<1x32xf32> to vector<1xf32>
    %17 = vector.shape_cast %16 : vector<1xf32> to vector<1x1xf32>
    %cst_13 = arith.constant 3.200000e+01 : f32
    %18 = vector.broadcast %cst_13 : f32 to vector<1x1xf32>
    %19 = arith.divf %17, %18 : vector<1x1xf32>
    %20 = vector.broadcast %19 : vector<1x1xf32> to vector<1x32xf32>
    %21 = arith.subf %15, %20 : vector<1x32xf32>
    %22 = arith.mulf %21, %21 : vector<1x32xf32>
    %cst_14 = arith.constant dense<0.000000e+00> : vector<1xf32>
    %23 = vector.multi_reduction <add>, %22, %cst_14 [1] : vector<1x32xf32> to vector<1xf32>
    %24 = vector.shape_cast %23 : vector<1xf32> to vector<1x1xf32>
    %cst_15 = arith.constant 3.200000e+01 : f32
    %25 = vector.broadcast %cst_15 : f32 to vector<1x1xf32>
    %26 = arith.divf %24, %25 : vector<1x1xf32>
    %27 = vector.broadcast %19 : vector<1x1xf32> to vector<1x32xf32>
    %28 = arith.subf %15, %27 : vector<1x32xf32>
    %cst_16 = arith.constant 9.99999974E-6 : f32
    %29 = vector.broadcast %cst_16 : f32 to vector<1x1xf32>
    %30 = arith.addf %26, %29 : vector<1x1xf32>
    %31 = math.rsqrt %30 : vector<1x1xf32>
    %32 = vector.broadcast %31 : vector<1x1xf32> to vector<1x32xf32>
    %33 = arith.mulf %28, %32 : vector<1x32xf32>
    %34 = arith.mulf %33, %2 : vector<1x32xf32>
    %35 = arith.addf %34, %3 : vector<1x32xf32>
    %36 = arith.addf %15, %35 : vector<1x32xf32>
    %c0_17 = arith.constant 0 : index
    %c0_18 = arith.constant 0 : index
    %37 = vector.load %arg4[%c0_17, %c0_18] : memref<32x64xf32, #tpu.memory_space<vmem>>, vector<32x64xf32>
    %cst_19 = arith.constant dense<0.000000e+00> : vector<1x64xf32>
    %38 = tpu.matmul %36, %37, %cst_19 {dimension_numbers = #tpu.dot_dimension_numbers<[1], [0], [0], [1], [0, 0, 1, 1], [], []>} : vector<1x32xf32>, vector<32x64xf32>, vector<1x64xf32> -> vector<1x64xf32>
    %cst_20 = arith.constant dense<0.000000e+00> : vector<1xf32>
    %39 = vector.multi_reduction <add>, %38, %cst_20 [1] : vector<1x64xf32> to vector<1xf32>
    %40 = vector.shape_cast %39 : vector<1xf32> to vector<1x1xf32>
    %cst_21 = arith.constant 6.400000e+01 : f32
    %41 = vector.broadcast %cst_21 : f32 to vector<1x1xf32>
    %42 = arith.divf %40, %41 : vector<1x1xf32>
    %43 = vector.broadcast %42 : vector<1x1xf32> to vector<1x64xf32>
    %44 = arith.subf %38, %43 : vector<1x64xf32>
    %45 = arith.mulf %44, %44 : vector<1x64xf32>
    %cst_22 = arith.constant dense<0.000000e+00> : vector<1xf32>
    %46 = vector.multi_reduction <add>, %45, %cst_22 [1] : vector<1x64xf32> to vector<1xf32>
    %47 = vector.shape_cast %46 : vector<1xf32> to vector<1x1xf32>
    %cst_23 = arith.constant 6.400000e+01 : f32
    %48 = vector.broadcast %cst_23 : f32 to vector<1x1xf32>
    %49 = arith.divf %47, %48 : vector<1x1xf32>
    %50 = vector.broadcast %42 : vector<1x1xf32> to vector<1x64xf32>
    %51 = arith.subf %38, %50 : vector<1x64xf32>
    %cst_24 = arith.constant 9.99999974E-6 : f32
    %52 = vector.broadcast %cst_24 : f32 to vector<1x1xf32>
    %53 = arith.addf %49, %52 : vector<1x1xf32>
    %54 = math.rsqrt %53 : vector<1x1xf32>
    %55 = vector.broadcast %54 : vector<1x1xf32> to vector<1x64xf32>
    %56 = arith.mulf %51, %55 : vector<1x64xf32>
    %57 = arith.mulf %56, %8 : vector<1x64xf32>
    %58 = arith.addf %57, %9 : vector<1x64xf32>
    %cst_25 = arith.constant 0.000000e+00 : f32
    %59 = vector.broadcast %cst_25 : f32 to vector<1x64xf32>
    %60 = arith.maximumf %58, %59 : vector<1x64xf32>
    %c0_26 = arith.constant 0 : index
    %c0_27 = arith.constant 0 : index
    %61 = vector.load %arg5[%c0_26, %c0_27] : memref<64x32xf32, #tpu.memory_space<vmem>>, vector<64x32xf32>
    %cst_28 = arith.constant dense<0.000000e+00> : vector<1x32xf32>
    %62 = tpu.matmul %60, %61, %cst_28 {dimension_numbers = #tpu.dot_dimension_numbers<[1], [0], [0], [1], [0, 0, 1, 1], [], []>} : vector<1x64xf32>, vector<64x32xf32>, vector<1x32xf32> -> vector<1x32xf32>
    %cst_29 = arith.constant dense<0.000000e+00> : vector<1xf32>
    %63 = vector.multi_reduction <add>, %62, %cst_29 [1] : vector<1x32xf32> to vector<1xf32>
    %64 = vector.shape_cast %63 : vector<1xf32> to vector<1x1xf32>
    %cst_30 = arith.constant 3.200000e+01 : f32
    %65 = vector.broadcast %cst_30 : f32 to vector<1x1xf32>
    %66 = arith.divf %64, %65 : vector<1x1xf32>
    %67 = vector.broadcast %66 : vector<1x1xf32> to vector<1x32xf32>
    %68 = arith.subf %62, %67 : vector<1x32xf32>
    %69 = arith.mulf %68, %68 : vector<1x32xf32>
    %cst_31 = arith.constant dense<0.000000e+00> : vector<1xf32>
    %70 = vector.multi_reduction <add>, %69, %cst_31 [1] : vector<1x32xf32> to vector<1xf32>
    %71 = vector.shape_cast %70 : vector<1xf32> to vector<1x1xf32>
    %cst_32 = arith.constant 3.200000e+01 : f32
    %72 = vector.broadcast %cst_32 : f32 to vector<1x1xf32>
    %73 = arith.divf %71, %72 : vector<1x1xf32>
    %74 = vector.broadcast %66 : vector<1x1xf32> to vector<1x32xf32>
    %75 = arith.subf %62, %74 : vector<1x32xf32>
    %cst_33 = arith.constant 9.99999974E-6 : f32
    %76 = vector.broadcast %cst_33 : f32 to vector<1x1xf32>
    %77 = arith.addf %73, %76 : vector<1x1xf32>
    %78 = math.rsqrt %77 : vector<1x1xf32>
    %79 = vector.broadcast %78 : vector<1x1xf32> to vector<1x32xf32>
    %80 = arith.mulf %75, %79 : vector<1x32xf32>
    %81 = arith.mulf %80, %4 : vector<1x32xf32>
    %82 = arith.addf %81, %5 : vector<1x32xf32>
    %cst_34 = arith.constant 0.000000e+00 : f32
    %83 = vector.broadcast %cst_34 : f32 to vector<1x32xf32>
    %84 = arith.maximumf %82, %83 : vector<1x32xf32>
    %cst_35 = arith.constant dense<0.000000e+00> : vector<1xf32>
    %85 = vector.multi_reduction <add>, %84, %cst_35 [1] : vector<1x32xf32> to vector<1xf32>
    %86 = vector.shape_cast %85 : vector<1xf32> to vector<1x1xf32>
    %cst_36 = arith.constant 3.200000e+01 : f32
    %87 = vector.broadcast %cst_36 : f32 to vector<1x1xf32>
    %88 = arith.divf %86, %87 : vector<1x1xf32>
    %89 = vector.broadcast %88 : vector<1x1xf32> to vector<1x32xf32>
    %90 = arith.subf %84, %89 : vector<1x32xf32>
    %91 = arith.mulf %90, %90 : vector<1x32xf32>
    %cst_37 = arith.constant dense<0.000000e+00> : vector<1xf32>
    %92 = vector.multi_reduction <add>, %91, %cst_37 [1] : vector<1x32xf32> to vector<1xf32>
    %93 = vector.shape_cast %92 : vector<1xf32> to vector<1x1xf32>
    %cst_38 = arith.constant 3.200000e+01 : f32
    %94 = vector.broadcast %cst_38 : f32 to vector<1x1xf32>
    %95 = arith.divf %93, %94 : vector<1x1xf32>
    %96 = vector.broadcast %88 : vector<1x1xf32> to vector<1x32xf32>
    %97 = arith.subf %84, %96 : vector<1x32xf32>
    %cst_39 = arith.constant 9.99999974E-6 : f32
    %98 = vector.broadcast %cst_39 : f32 to vector<1x1xf32>
    %99 = arith.addf %95, %98 : vector<1x1xf32>
    %100 = math.rsqrt %99 : vector<1x1xf32>
    %101 = vector.broadcast %100 : vector<1x1xf32> to vector<1x32xf32>
    %102 = arith.mulf %97, %101 : vector<1x32xf32>
    %103 = arith.mulf %102, %6 : vector<1x32xf32>
    %104 = arith.addf %103, %7 : vector<1x32xf32>
    %105 = arith.addf %84, %104 : vector<1x32xf32>
    %106 = vector.shape_cast %105 : vector<1x32xf32> to vector<1x1x32xf32>
    %107 = vector.shape_cast %106 : vector<1x1x32xf32> to vector<1x1x32xf32>
    %108 = vector.broadcast %107 : vector<1x1x32xf32> to vector<1x8x32xf32>
    %c0_40 = arith.constant 0 : index
    %c0_41 = arith.constant 0 : index
    %c0_42 = arith.constant 0 : index
    %109 = vector.load %arg8[%c0_40, %c0_41, %c0_42] : memref<1x8x32xf32, #tpu.memory_space<vmem>>, vector<1x8x32xf32>
    tpu.vector_store %arg8[%c0_40, %c0_41, %c0_42], %108 {strides = array<i32>} : memref<1x8x32xf32, #tpu.memory_space<vmem>>, vector<1x8x32xf32>,
    return
  }
  func.func @transform_0(%arg0: i32) -> (i32, i32, i32) {
    %c0_i32 = arith.constant 0 : i32
    %c0_i32_0 = arith.constant 0 : i32
    %c0_i32_1 = arith.constant 0 : i32
    return %arg0, %c0_i32, %c0_i32_0 : i32, i32, i32
  }
  func.func @transform_1(%arg0: i32) -> (i32, i32) {
    %c0_i32 = arith.constant 0 : i32
    %c0_i32_0 = arith.constant 0 : i32
    %c0_i32_1 = arith.constant 0 : i32
    return %c0_i32, %c0_i32_0 : i32, i32
  }
  func.func @transform_2(%arg0: i32) -> (i32, i32) {
    %c0_i32 = arith.constant 0 : i32
    %c0_i32_0 = arith.constant 0 : i32
    %c0_i32_1 = arith.constant 0 : i32
    return %c0_i32, %c0_i32_0 : i32, i32
  }
  func.func @transform_3(%arg0: i32) -> (i32, i32) {
    %c0_i32 = arith.constant 0 : i32
    %c0_i32_0 = arith.constant 0 : i32
    %c0_i32_1 = arith.constant 0 : i32
    return %c0_i32, %c0_i32_0 : i32, i32
  }
  func.func @transform_4(%arg0: i32) -> (i32, i32) {
    %c0_i32 = arith.constant 0 : i32
    %c0_i32_0 = arith.constant 0 : i32
    %c0_i32_1 = arith.constant 0 : i32
    return %c0_i32, %c0_i32_0 : i32, i32
  }
  func.func @transform_5(%arg0: i32) -> (i32, i32) {
    %c0_i32 = arith.constant 0 : i32
    %c0_i32_0 = arith.constant 0 : i32
    %c0_i32_1 = arith.constant 0 : i32
    return %c0_i32, %c0_i32_0 : i32, i32
  }
  func.func @transform_6(%arg0: i32) -> (i32, i32) {
    %c0_i32 = arith.constant 0 : i32
    %c0_i32_0 = arith.constant 0 : i32
    %c0_i32_1 = arith.constant 0 : i32
    return %c0_i32, %c0_i32_0 : i32, i32
  }
  func.func @transform_7(%arg0: i32) -> (i32, i32, i32) {
    %c0_i32 = arith.constant 0 : i32
    %c0_i32_0 = arith.constant 0 : i32
    %c0_i32_1 = arith.constant 0 : i32
    return %arg0, %c0_i32, %c0_i32_0 : i32, i32, i32
  }
}

</mosaic_0001>

<llo_original>
// kernel: tpu_custom_call.1
$region0: #{tpu_custom_call.1}
  #allocation0 [shape = 'u32[]', space=smem, size = 0x4, offset = 0x4, fixed_abs, tag = 'smem constant byte address 0x4 - core index']
  #allocation1 [shape = 'u32[144,128]{1,0:T(1,128)}', space=vmem, size = 0x12000, scoped, tag = 'internal scratch']
  %s0 = inlined_call_operand.hbm [shape: f32[2,8,32], index: 0, kind: input, shape index: {}]
  %s1 = inlined_call_operand.vmem [shape: f32[32,32], index: 1, kind: input, shape index: {}]
  %s2 = inlined_call_operand.vmem [shape: f32[32,32], index: 2, kind: input, shape index: {}]
  %s3 = inlined_call_operand.vmem [shape: f32[32,64], index: 3, kind: input, shape index: {}]
  %s4 = inlined_call_operand.vmem [shape: f32[64,32], index: 4, kind: input, shape index: {}]
  %s5 = inlined_call_operand.vmem [shape: f32[8,32], index: 5, kind: input, shape index: {}]
  %s6 = inlined_call_operand.hbm [shape: f32[8,64], index: 6, kind: input, shape index: {}]
  %s7 = inlined_call_operand.hbm [shape: f32[2,8,32], index: 7, kind: output, shape index: {}]
  %s8 = sld [smem:[#allocation0]]
  $region69: #{tpu_custom_call.1} parent=0
    _
  %s10 = ssub.s32 1, %s8
  %s11 = scalar_select 0, %s10, %s8
  $region1: #{tpu_custom_call.1} parent=0
    #allocation2 [shape = 'u8[8192]{0}', space=vmem, size = 0x2000, scoped, tag = 'input window, operand 0']
    #allocation3 [shape = 's32[2]{0}', space=sflag, size = 0x8, scoped, tag = 'scoped memory for tpu_custom_call.1']
    #allocation4 [shape = 's32[2]{0}', space=sflag, size = 0x8, scoped, tag = 'scoped memory for tpu_custom_call.1']
    #allocation5 [shape = 'u8[4096]{0}', space=vmem, size = 0x1000, scoped, tag = 'input window, operand 6, single buffered']
    #allocation6 [shape = 's32[1]{0}', space=sflag, size = 0x4, scoped, tag = 'scoped memory for tpu_custom_call.1']
    #allocation7 [shape = 'u8[8192]{0}', space=vmem, size = 0x2000, scoped, tag = 'output window, operand 0']
    %12 = vsyncpa [#allocation3], 0
    %s13 = scalar_lea.sflag [#allocation3], 1
    %14 = vsyncpa %s13, 0
    %15 = vsyncpa [#allocation6], 0
    %16 = vsyncpa [#allocation4], 0
    %s17 = scalar_lea.sflag [#allocation4], 1
    %18 = vsyncpa %s17, 0
    loop: start=0, step=1, limit=4
    $region2: #{tpu_custom_call.1} parent=1 // loop_pre_header
      _
    $region3: #{tpu_custom_call.1} parent=1 // loop_header
      %s20 = sphi 0, %s24
      %p21 = scmp.ge.s32.totalorder %s20, 4
      %s30 = sphi 0, %s32
      %s33 = sphi 0, %s30
      %s34 = sphi 0, %s33
      %s50 = sphi 0, %s34
      %s54 = sphi 0, %s54
      %s56 = sphi 0, %s54
      %s57 = sphi 0, %s56
      %s71 = sphi 0, %s57
      %s75 = sphi 0, %s75
      %s77 = sphi 0, %s75
      %s78 = sphi 0, %s77
      %s92 = sphi 0, %s78
      %s96 = sphi 0, %s96
      %s98 = sphi 0, %s96
      %s99 = sphi 0, %s98
      %s113 = sphi 0, %s99
      %s117 = sphi 0, %s117
      %s119 = sphi 0, %s117
      %s120 = sphi 0, %s119
      %s134 = sphi 0, %s120
      %s138 = sphi 0, %s138
      %s140 = sphi 0, %s138
      %s141 = sphi 0, %s140
      %s155 = sphi 0, %s141
      %s159 = sphi 0, %s159
      %s161 = sphi 0, %s159
      %s162 = sphi 0, %s161
      %s176 = sphi 0, %s162
      %s182 = sphi 0, %s184
      %s185 = sphi 0, %s182
      %s186 = sphi 0, %s185
      %s202 = sphi 0, %s186
    $region4: #{tpu_custom_call.1} parent=1 // loop_header_branch
      %23 = sbr.rel (%p21) target = $region8
    $region5: #{tpu_custom_call.1} parent=1 // loop_body
      %s25 = ssub.s32 %s20, 1
      %s26 = ssub.s32 %s20, 2
      %s27 = sadd.s32 %s20, 1
      %s28 = ssub.s32 %s20, %s27
      %p29 = scmp.eq.s32.totalorder %s28, 0
      %s31 = sadd.s32 %s30, 1
      %s32 = scalar_select %p29, %s30, %s31
      %p35 = pneg %p29
      %p36 = scmp.eq.s32.totalorder %s20, 1
      %p37 = por %p35, %p36
      %p38 = scmp.ne.s32.totalorder %s30, %s33
      %p39 = scmp.eq.s32.totalorder %s20, 0
      %p40 = por %p38, %p39
      %p41 = scmp.ne.s32.totalorder %s30, %s33
      %p42 = scmp.eq.s32.totalorder %s25, 1
      %p43 = por %p41, %p42
      %p44 = scmp.ne.s32.totalorder %s33, %s34
      %p45 = scmp.eq.s32.totalorder %s25, 0
      %p46 = por %p44, %p45
      %p47 = scmp.ne.s32.totalorder %s33, %s34
      %p48 = scmp.eq.s32.totalorder %s26, 1
      %p49 = por %p47, %p48
      %p51 = scmp.ne.s32.totalorder %s34, %s50
      %p52 = scmp.eq.s32.totalorder %s26, 0
      %p53 = por %p51, %p52
      %s55 = sadd.s32 %s54, 1
      %p58 = scmp.eq.s32.totalorder %s20, 1
      %p59 = scmp.ne.s32.totalorder %s54, %s56
      %p60 = scmp.eq.s32.totalorder %s20, 0
      %p61 = por %p59, %p60
      %p62 = scmp.ne.s32.totalorder %s54, %s56
      %p63 = scmp.eq.s32.totalorder %s25, 1
      %p64 = por %p62, %p63
      %p65 = scmp.ne.s32.totalorder %s56, %s57
      %p66 = scmp.eq.s32.totalorder %s25, 0
      %p67 = por %p65, %p66
      %p68 = scmp.ne.s32.totalorder %s56, %s57
      %p69 = scmp.eq.s32.totalorder %s26, 1
      %p70 = por %p68, %p69
      %p72 = scmp.ne.s32.totalorder %s57, %s71
      %p73 = scmp.eq.s32.totalorder %s26, 0
      %p74 = por %p72, %p73
      %s76 = sadd.s32 %s75, 1
      %p79 = scmp.eq.s32.totalorder %s20, 1
      %p80 = scmp.ne.s32.totalorder %s75, %s77
      %p81 = scmp.eq.s32.totalorder %s20, 0
      %p82 = por %p80, %p81
      %p83 = scmp.ne.s32.totalorder %s75, %s77
      %p84 = scmp.eq.s32.totalorder %s25, 1
      %p85 = por %p83, %p84
      %p86 = scmp.ne.s32.totalorder %s77, %s78
      %p87 = scmp.eq.s32.totalorder %s25, 0
      %p88 = por %p86, %p87
      %p89 = scmp.ne.s32.totalorder %s77, %s78
      %p90 = scmp.eq.s32.totalorder %s26, 1
      %p91 = por %p89, %p90
      %p93 = scmp.ne.s32.totalorder %s78, %s92
      %p94 = scmp.eq.s32.totalorder %s26, 0
      %p95 = por %p93, %p94
      %s97 = sadd.s32 %s96, 1
      %p100 = scmp.eq.s32.totalorder %s20, 1
      %p101 = scmp.ne.s32.totalorder %s96, %s98
      %p102 = scmp.eq.s32.totalorder %s20, 0
      %p103 = por %p101, %p102
      %p104 = scmp.ne.s32.totalorder %s96, %s98
      %p105 = scmp.eq.s32.totalorder %s25, 1
      %p106 = por %p104, %p105
      %p107 = scmp.ne.s32.totalorder %s98, %s99
      %p108 = scmp.eq.s32.totalorder %s25, 0
      %p109 = por %p107, %p108
      %p110 = scmp.ne.s32.totalorder %s98, %s99
      %p111 = scmp.eq.s32.totalorder %s26, 1
      %p112 = por %p110, %p111
      %p114 = scmp.ne.s32.totalorder %s99, %s113
      %p115 = scmp.eq.s32.totalorder %s26, 0
      %p116 = por %p114, %p115
      %s118 = sadd.s32 %s117, 1
      %p121 = scmp.eq.s32.totalorder %s20, 1
      %p122 = scmp.ne.s32.totalorder %s117, %s119
      %p123 = scmp.eq.s32.totalorder %s20, 0
      %p124 = por %p122, %p123
      %p125 = scmp.ne.s32.totalorder %s117, %s119
      %p126 = scmp.eq.s32.totalorder %s25, 1
      %p127 = por %p125, %p126
      %p128 = scmp.ne.s32.totalorder %s119, %s120
      %p129 = scmp.eq.s32.totalorder %s25, 0
      %p130 = por %p128, %p129
      %p131 = scmp.ne.s32.totalorder %s119, %s120
      %p132 = scmp.eq.s32.totalorder %s26, 1
      %p133 = por %p131, %p132
      %p135 = scmp.ne.s32.totalorder %s120, %s134
      %p136 = scmp.eq.s32.totalorder %s26, 0
      %p137 = por %p135, %p136
      %s139 = sadd.s32 %s138, 1
      %p142 = scmp.eq.s32.totalorder %s20, 1
      %p143 = scmp.ne.s32.totalorder %s138, %s140
      %p144 = scmp.eq.s32.totalorder %s20, 0
      %p145 = por %p143, %p144
      %p146 = scmp.ne.s32.totalorder %s138, %s140
      %p147 = scmp.eq.s32.totalorder %s25, 1
      %p148 = por %p146, %p147
      %p149 = scmp.ne.s32.totalorder %s140, %s141
      %p150 = scmp.eq.s32.totalorder %s25, 0
      %p151 = por %p149, %p150
      %p152 = scmp.ne.s32.totalorder %s140, %s141
      %p153 = scmp.eq.s32.totalorder %s26, 1
      %p154 = por %p152, %p153
      %p156 = scmp.ne.s32.totalorder %s141, %s155
      %p157 = scmp.eq.s32.totalorder %s26, 0
      %p158 = por %p156, %p157
      %s160 = sadd.s32 %s159, 1
      %p163 = scmp.eq.s32.totalorder %s20, 1
      %p164 = scmp.ne.s32.totalorder %s159, %s161
      %p165 = scmp.eq.s32.totalorder %s20, 0
      %p166 = por %p164, %p165
      %p167 = scmp.ne.s32.totalorder %s159, %s161
      %p168 = scmp.eq.s32.totalorder %s25, 1
      %p169 = por %p167, %p168
      %p170 = scmp.ne.s32.totalorder %s161, %s162
      %p171 = scmp.eq.s32.totalorder %s25, 0
      %p172 = por %p170, %p171
      %p173 = scmp.ne.s32.totalorder %s161, %s162
      %p174 = scmp.eq.s32.totalorder %s26, 1
      %p175 = por %p173, %p174
      %p177 = scmp.ne.s32.totalorder %s162, %s176
      %p178 = scmp.eq.s32.totalorder %s26, 0
      %p179 = por %p177, %p178
      %s180 = ssub.s32 %s20, %s27
      %p181 = scmp.eq.s32.totalorder %s180, 0
      %s183 = sadd.s32 %s182, 1
      %s184 = scalar_select %p181, %s182, %s183
      %p187 = pneg %p181
      %p188 = scmp.eq.s32.totalorder %s20, 1
      %p189 = por %p187, %p188
      %p190 = scmp.ne.s32.totalorder %s182, %s185
      %p191 = scmp.eq.s32.totalorder %s20, 0
      %p192 = por %p190, %p191
      %p193 = scmp.ne.s32.totalorder %s182, %s185
      %p194 = scmp.eq.s32.totalorder %s25, 1
      %p195 = por %p193, %p194
      %p196 = scmp.ne.s32.totalorder %s185, %s186
      %p197 = scmp.eq.s32.totalorder %s25, 0
      %p198 = por %p196, %p197
      %p199 = scmp.ne.s32.totalorder %s185, %s186
      %p200 = scmp.eq.s32.totalorder %s26, 1
      %p201 = por %p199, %p200
      %p203 = scmp.ne.s32.totalorder %s186, %s202
      %p204 = scmp.eq.s32.totalorder %s26, 0
      %p205 = por %p203, %p204
      %p206 = scmp.le.s32.totalorder 1, %s20
      %p207 = scmp.lt.s32.totalorder %s20, 3
      %p208 = pnand %p206, %p207
      %p209 = pneg %p208
      // Predicated region
      $region9: #{tpu_custom_call.1} parent=5 // pred_check
        _
      $region10: #{tpu_custom_call.1} parent=5 // pred_check_branch
        %211 = sbr.rel (%p208) target = $region12
      $region11: #{tpu_custom_call.1} parent=5 // pred_region
        %s212 = ssub.s32 %s20, 1
        // Predicated region
        $region13: #{tpu_custom_call.1} parent=11 // pred_check
          %p213 = pneg %p67
        $region14: #{tpu_custom_call.1} parent=11 // pred_check_branch
          %215 = sbr.rel (%p213) target = $region16
        $region15: #{tpu_custom_call.1} parent=11 // pred_region
          _
        $region16: #{tpu_custom_call.1} parent=11 // pred_fallthru
          _
        // Predicated region
        $region17: #{tpu_custom_call.1} parent=11 // pred_check
          %p216 = pneg %p88
        $region18: #{tpu_custom_call.1} parent=11 // pred_check_branch
          %218 = sbr.rel (%p216) target = $region20
        $region19: #{tpu_custom_call.1} parent=11 // pred_region
          _
        $region20: #{tpu_custom_call.1} parent=11 // pred_fallthru
          _
        // Predicated region
        $region21: #{tpu_custom_call.1} parent=11 // pred_check
          %p219 = pneg %p109
        $region22: #{tpu_custom_call.1} parent=11 // pred_check_branch
          %221 = sbr.rel (%p219) target = $region24
        $region23: #{tpu_custom_call.1} parent=11 // pred_region
          _
        $region24: #{tpu_custom_call.1} parent=11 // pred_fallthru
          _
        // Predicated region
        $region25: #{tpu_custom_call.1} parent=11 // pred_check
          %p222 = pneg %p130
        $region26: #{tpu_custom_call.1} parent=11 // pred_check_branch
          %224 = sbr.rel (%p222) target = $region28
        $region27: #{tpu_custom_call.1} parent=11 // pred_region
          _
        $region28: #{tpu_custom_call.1} parent=11 // pred_fallthru
          _
        // Predicated region
        $region29: #{tpu_custom_call.1} parent=11 // pred_check
          %p225 = pneg %p151
        $region30: #{tpu_custom_call.1} parent=11 // pred_check_branch
          %227 = sbr.rel (%p225) target = $region32
        $region31: #{tpu_custom_call.1} parent=11 // pred_region
          _
        $region32: #{tpu_custom_call.1} parent=11 // pred_fallthru
          _
        // Predicated region
        $region33: #{tpu_custom_call.1} parent=11 // pred_check
          %p228 = pneg %p172
        $region34: #{tpu_custom_call.1} parent=11 // pred_check_branch
          %230 = sbr.rel (%p228) target = $region36
        $region35: #{tpu_custom_call.1} parent=11 // pred_region
          %s232 = ssub.s32 128, 128
          %233 = vsyncadd [#allocation6], %s232
          %s235 = sshll.u32 [#allocation5], 4
          %s236 = int_to_ptr.vmem [resolvable:$true] %s235
          %238 = dma.hbm_to_vmem [thread:$0]  %s6, 128, %s236, [#allocation6]
        $region36: #{tpu_custom_call.1} parent=11 // pred_fallthru
          _
      $region12: #{tpu_custom_call.1} parent=5 // pred_fallthru
        _
      %p239 = scmp.lt.s32.totalorder %s20, 2
      // Predicated region
      $region37: #{tpu_custom_call.1} parent=5 // pred_check
        %p240 = pneg %p239
      $region38: #{tpu_custom_call.1} parent=5 // pred_check_branch
        %242 = sbr.rel (%p240) target = $region40
      $region39: #{tpu_custom_call.1} parent=5 // pred_region
        // Predicated region
        $region41: #{tpu_custom_call.1} parent=39 // pred_check
          %p243 = pneg %p40
        $region42: #{tpu_custom_call.1} parent=39 // pred_check_branch
          %245 = sbr.rel (%p243) target = $region44
        $region43: #{tpu_custom_call.1} parent=39 // pred_region
          %s246 = sand.u32 %s30, 1
          %s247 = scalar_lea.sflag [#allocation3], %s246
          %s248 = sand.u32 %s30, 1
          %s249 = smul.addr %s248, 8
          %s250 = scalar_lea.vmem [#allocation2], %s249
          %s252 = ssub.s32 128, 128
          %253 = vsyncadd %s247, %s252
          %s254 = smul.addr %s20, 128
          %s255 = scalar_lea.hbm %s0, %s254
          %s257 = sshll.u32 %s250, 4
          %s258 = int_to_ptr.vmem [resolvable:$true] %s257
          %260 = dma.hbm_to_vmem [thread:$0]  %s255, 128, %s258, %s247
        $region44: #{tpu_custom_call.1} parent=39 // pred_fallthru
          _
      $region40: #{tpu_custom_call.1} parent=5 // pred_fallthru
        _
      %p261 = scmp.le.s32.totalorder 1, %s20
      %p262 = scmp.lt.s32.totalorder %s20, 3
      %p263 = pnand %p261, %p262
      %p264 = pneg %p263
      // Predicated region
      $region45: #{tpu_custom_call.1} parent=5 // pred_check
        _
      $region46: #{tpu_custom_call.1} parent=5 // pred_check_branch
        %266 = sbr.rel (%p263) target = $region48
      $region47: #{tpu_custom_call.1} parent=5 // pred_region
        %s267 = ssub.s32 %s20, 1
        %s268 = sand.u32 %s33, 1
        %s269 = scalar_lea.sflag [#allocation3], %s268
        %s270 = sand.u32 %s33, 1
        %s271 = smul.addr %s270, 8
        %s272 = scalar_lea.vmem [#allocation2], %s271
        // Predicated region
        $region49: #{tpu_custom_call.1} parent=47 // pred_check
          %p273 = pneg %p46
        $region50: #{tpu_custom_call.1} parent=47 // pred_check_branch
          %275 = sbr.rel (%p273) target = $region52
        $region51: #{tpu_custom_call.1} parent=47 // pred_region
          %276 = dma.done %s269, 128
        $region52: #{tpu_custom_call.1} parent=47 // pred_fallthru
          _
        // Predicated region
        $region53: #{tpu_custom_call.1} parent=47 // pred_check
          %p277 = pneg %p172
        $region54: #{tpu_custom_call.1} parent=47 // pred_check_branch
          %279 = sbr.rel (%p277) target = $region56
        $region55: #{tpu_custom_call.1} parent=47 // pred_region
          %280 = dma.done [#allocation6], 128
        $region56: #{tpu_custom_call.1} parent=47 // pred_fallthru
          _
        %s281 = sand.u32 %s33, 1
        %s282 = scalar_lea.sflag [#allocation3], %s281
        %s283 = sand.u32 %s33, 1
        %s284 = smul.addr %s283, 8
        %s285 = scalar_lea.vmem [#allocation2], %s284
        %p286 = pneg %p46
        %p287 = pneg %p43
        %p288 = pneg %p67
        %p289 = pneg %p64
        %p290 = pneg %p88
        %p291 = pneg %p85
        %p292 = pneg %p109
        %p293 = pneg %p106
        %p294 = pneg %p130
        %p295 = pneg %p127
        %p296 = pneg %p151
        %p297 = pneg %p148
        %p298 = pneg %p172
        %p299 = pneg %p169
        %p300 = pneg %p198
        %p301 = pneg %p195
        %s302 = sand.u32 %s185, 1
        %s303 = scalar_lea.sflag [#allocation4], %s302
        %s304 = sand.u32 %s185, 1
        %s305 = smul.addr %s304, 8
        %s306 = scalar_lea.vmem [#allocation7], %s305
        %v307 = vld [vmem:[%s5] sm:$0xff]
        %v308 = vld [vmem:[#allocation5] sm:$0xff]
        %v309 = vld [vmem:[%s272] sm:$0xff]
        %vm310 = vcmask 261120
        %v311 = vsel %vm310, %v309, 0.0
        %v312 = vrot.slane %v311, 4
        %v313 = vadd.f32 %v311, %v312
        %v314 = vrot.slane %v313, 2
        %v315 = vadd.f32 %v313, %v314
        %v316 = vrot.slane %v315, 1
        %v317 = vadd.f32 %v315, %v316
        %v318 = vld [vmem:[%s1] sm:$0xff]
        %v319 = vld [vmem:[%s1 + $0x8] sm:$0xff]
        %v320 = vld [vmem:[%s1 + $0x10] sm:$0xff]
        %v321 = vld [vmem:[%s1 + $0x18] sm:$0xff]
        %v323 = vsel %vm310, %v317, 0
        %325 = vmatprep.subr.mxu0 0.0
        %326 = vmatpush1.msra.mxu0 0.0
        %327 = vmatprep.subr.mxu0 0.0
        %328 = vmatpush1.msra.mxu0 0.0
        %329 = vmatprep.subr.mxu0 0.0
        %330 = vmatpush1.msra.mxu0 0.0
        %331 = vmatprep.subr.mxu0 0.0
        %332 = vmatpush1.msra.mxu0 0.0
        %333 = vmatprep.subr.mxu0 0.0
        %334 = vmatpush1.msra.mxu0 0.0
        %335 = vmatprep.subr.mxu0 0.0
        %336 = vmatpush1.msra.mxu0 0.0
        %337 = vmatprep.subr.mxu0 0.0
        %338 = vmatpush1.msra.mxu0 0.0
        %339 = vmatprep.subr.mxu0 0.0
        %340 = vmatpush1.msra.mxu0 0.0
        %341 = vmatprep.subr.mxu0 0.0
        %342 = vmatpush1.msra.mxu0 0.0
        %343 = vmatprep.subr.mxu0 0.0
        %344 = vmatpush1.msra.mxu0 0.0
        %345 = vmatprep.subr.mxu0 0.0
        %346 = vmatpush1.msra.mxu0 0.0
        %347 = vmatprep.subr.mxu0 0.0
        %348 = vmatpush1.msra.mxu0 0.0
        %349 = vmatprep.subr.mxu0 0.0
        %350 = vmatpush1.msra.mxu0 %v321
        %351 = vmatprep.subr.mxu0 0.0
        %352 = vmatpush1.msra.mxu0 %v320
        %353 = vmatprep.subr.mxu0 0.0
        %354 = vmatpush1.msra.mxu0 %v319
        %355 = vmatprep.subr.mxu0 0.0
        %356 = vmatpush1.msra.mxu0 %v318
        %357 = vmatprep.subr.mxu0 0.0
        %358 = vmatpush2.msra.mxu0 0.0
        %359 = vmatprep.subr.mxu0 0.0
        %360 = vmatpush2.msra.mxu0 0.0
        %361 = vmatprep.subr.mxu0 0.0
        %362 = vmatpush2.msra.mxu0 0.0
        %363 = vmatprep.subr.mxu0 0.0
        %364 = vmatpush2.msra.mxu0 0.0
        %365 = vmatprep.subr.mxu0 0.0
        %366 = vmatpush2.msra.mxu0 0.0
        %367 = vmatprep.subr.mxu0 0.0
        %368 = vmatpush2.msra.mxu0 0.0
        %369 = vmatprep.subr.mxu0 0.0
        %370 = vmatpush2.msra.mxu0 0.0
        %371 = vmatprep.subr.mxu0 0.0
        %372 = vmatpush2.msra.mxu0 0.0
        %373 = vmatprep.subr.mxu0 0.0
        %374 = vmatpush2.msra.mxu0 0.0
        %375 = vmatprep.subr.mxu0 0.0
        %376 = vmatpush2.msra.mxu0 0.0
        %377 = vmatprep.subr.mxu0 0.0
        %378 = vmatpush2.msra.mxu0 0.0
        %379 = vmatprep.subr.mxu0 0.0
        %380 = vmatpush2.msra.mxu0 0.0
        %381 = vmatprep.subr.mxu0 0.0
        %382 = vmatpush2.msra.mxu0 0.0
        %383 = vmatprep.subr.mxu0 0.0
        %384 = vmatpush2.msra.mxu0 0.0
        %385 = vmatprep.subr.mxu0 0.0
        %386 = vmatpush2.msra.mxu0 0.0
        %387 = vmatprep.subr.mxu0 0.0
        %388 = vmatpush2.msra.mxu0 0.0
        %389 = vmatprep.mubr.f32.mxu0 0.0
        %390 = vmatmul.mubr.f32.gmra.mxu0 %v323
        %v391 = vpop.f32.mrf.mxu0
        %v392 = vadd.f32 0.0, %v391
        %v393 = vpop.f32.mrf.mxu0
        %394 = vdwg.mxu0
        %v395 = vld [vmem:[%s2] sm:$0xff]
        %v396 = vld [vmem:[%s2 + $0x8] sm:$0xff]
        %v397 = vld [vmem:[%s2 + $0x10] sm:$0xff]
        %v398 = vld [vmem:[%s2 + $0x18] sm:$0xff]
        %v400 = vsel %vm310, %v392, 0
        %402 = vmatprep.subr.mxu0 0.0
        %403 = vmatpush1.msra.mxu0 0.0
        %404 = vmatprep.subr.mxu0 0.0
        %405 = vmatpush1.msra.mxu0 0.0
        %406 = vmatprep.subr.mxu0 0.0
        %407 = vmatpush1.msra.mxu0 0.0
        %408 = vmatprep.subr.mxu0 0.0
        %409 = vmatpush1.msra.mxu0 0.0
        %410 = vmatprep.subr.mxu0 0.0
        %411 = vmatpush1.msra.mxu0 0.0
        %412 = vmatprep.subr.mxu0 0.0
        %413 = vmatpush1.msra.mxu0 0.0
        %414 = vmatprep.subr.mxu0 0.0
        %415 = vmatpush1.msra.mxu0 0.0
        %416 = vmatprep.subr.mxu0 0.0
        %417 = vmatpush1.msra.mxu0 0.0
        %418 = vmatprep.subr.mxu0 0.0
        %419 = vmatpush1.msra.mxu0 0.0
        %420 = vmatprep.subr.mxu0 0.0
        %421 = vmatpush1.msra.mxu0 0.0
        %422 = vmatprep.subr.mxu0 0.0
        %423 = vmatpush1.msra.mxu0 0.0
        %424 = vmatprep.subr.mxu0 0.0
        %425 = vmatpush1.msra.mxu0 0.0
        %426 = vmatprep.subr.mxu0 0.0
        %427 = vmatpush1.msra.mxu0 %v398
        %428 = vmatprep.subr.mxu0 0.0
        %429 = vmatpush1.msra.mxu0 %v397
        %430 = vmatprep.subr.mxu0 0.0
        %431 = vmatpush1.msra.mxu0 %v396
        %432 = vmatprep.subr.mxu0 0.0
        %433 = vmatpush1.msra.mxu0 %v395
        %434 = vmatprep.subr.mxu0 0.0
        %435 = vmatpush2.msra.mxu0 0.0
        %436 = vmatprep.subr.mxu0 0.0
        %437 = vmatpush2.msra.mxu0 0.0
        %438 = vmatprep.subr.mxu0 0.0
        %439 = vmatpush2.msra.mxu0 0.0
        %440 = vmatprep.subr.mxu0 0.0
        %441 = vmatpush2.msra.mxu0 0.0
        %442 = vmatprep.subr.mxu0 0.0
        %443 = vmatpush2.msra.mxu0 0.0
        %444 = vmatprep.subr.mxu0 0.0
        %445 = vmatpush2.msra.mxu0 0.0
        %446 = vmatprep.subr.mxu0 0.0
        %447 = vmatpush2.msra.mxu0 0.0
        %448 = vmatprep.subr.mxu0 0.0
        %449 = vmatpush2.msra.mxu0 0.0
        %450 = vmatprep.subr.mxu0 0.0
        %451 = vmatpush2.msra.mxu0 0.0
        %452 = vmatprep.subr.mxu0 0.0
        %453 = vmatpush2.msra.mxu0 0.0
        %454 = vmatprep.subr.mxu0 0.0
        %455 = vmatpush2.msra.mxu0 0.0
        %456 = vmatprep.subr.mxu0 0.0
        %457 = vmatpush2.msra.mxu0 0.0
        %458 = vmatprep.subr.mxu0 0.0
        %459 = vmatpush2.msra.mxu0 0.0
        %460 = vmatprep.subr.mxu0 0.0
        %461 = vmatpush2.msra.mxu0 0.0
        %462 = vmatprep.subr.mxu0 0.0
        %463 = vmatpush2.msra.mxu0 0.0
        %464 = vmatprep.subr.mxu0 0.0
        %465 = vmatpush2.msra.mxu0 0.0
        %466 = vmatprep.mubr.f32.mxu0 0.0
        %467 = vmatmul.mubr.f32.gmra.mxu0 %v400
        %v468 = vpop.f32.mrf.mxu0
        %v469 = vadd.f32 0.0, %v468
        %v470 = vpop.f32.mrf.mxu0
        %471 = vdwg.mxu0
        %vm472 = vcmask 253952
        %v473 = vsel %vm472, %v469, 0.0
        %474 = vadd.xlane.f32.xlu0 %v473
        %v475 = vpop.xlane.xlu0 %474
        %v476 = vrcp.pop 32.0
        %v477 = vmul.f32 %v475, %v476
        %v478 = vsub.f32 %v469, %v477
        %v479 = vmul.f32 %v478, %v478
        %v480 = vsel %vm472, %v479, 0.0
        %481 = vadd.xlane.f32.xlu0 %v480
        %v482 = vpop.xlane.xlu0 %481
        %v483 = vmul.f32 %v482, %v476
        %v484 = vadd.f32 %v483, 1e-05
        %v485 = vrsqrt.pop %v484
        %v486 = vmul.f32 %v478, %v485
        %v487 = vmul.f32 %v486, %v307
        %v489 = vrot.slane %v307, 1
        %v491 = vadd.f32 %v487, %v489
        %v492 = vadd.f32 %v469, %v491
        %v493 = vld [vmem:[%s3] sm:$0xff]
        %v494 = vld [vmem:[%s3 + $0x8] sm:$0xff]
        %v495 = vld [vmem:[%s3 + $0x10] sm:$0xff]
        %v496 = vld [vmem:[%s3 + $0x18] sm:$0xff]
        %v498 = vsel %vm310, %v492, 0
        %500 = vmatprep.subr.mxu0 0.0
        %501 = vmatpush1.msra.mxu0 0.0
        %502 = vmatprep.subr.mxu0 0.0
        %503 = vmatpush1.msra.mxu0 0.0
        %504 = vmatprep.subr.mxu0 0.0
        %505 = vmatpush1.msra.mxu0 0.0
        %506 = vmatprep.subr.mxu0 0.0
        %507 = vmatpush1.msra.mxu0 0.0
        %508 = vmatprep.subr.mxu0 0.0
        %509 = vmatpush1.msra.mxu0 0.0
        %510 = vmatprep.subr.mxu0 0.0
        %511 = vmatpush1.msra.mxu0 0.0
        %512 = vmatprep.subr.mxu0 0.0
        %513 = vmatpush1.msra.mxu0 0.0
        %514 = vmatprep.subr.mxu0 0.0
        %515 = vmatpush1.msra.mxu0 0.0
        %516 = vmatprep.subr.mxu0 0.0
        %517 = vmatpush1.msra.mxu0 0.0
        %518 = vmatprep.subr.mxu0 0.0
        %519 = vmatpush1.msra.mxu0 0.0
        %520 = vmatprep.subr.mxu0 0.0
        %521 = vmatpush1.msra.mxu0 0.0
        %522 = vmatprep.subr.mxu0 0.0
        %523 = vmatpush1.msra.mxu0 0.0
        %524 = vmatprep.subr.mxu0 0.0
        %525 = vmatpush1.msra.mxu0 %v496
        %526 = vmatprep.subr.mxu0 0.0
        %527 = vmatpush1.msra.mxu0 %v495
        %528 = vmatprep.subr.mxu0 0.0
        %529 = vmatpush1.msra.mxu0 %v494
        %530 = vmatprep.subr.mxu0 0.0
        %531 = vmatpush1.msra.mxu0 %v493
        %532 = vmatprep.subr.mxu0 0.0
        %533 = vmatpush2.msra.mxu0 0.0
        %534 = vmatprep.subr.mxu0 0.0
        %535 = vmatpush2.msra.mxu0 0.0
        %536 = vmatprep.subr.mxu0 0.0
        %537 = vmatpush2.msra.mxu0 0.0
        %538 = vmatprep.subr.mxu0 0.0
        %539 = vmatpush2.msra.mxu0 0.0
        %540 = vmatprep.subr.mxu0 0.0
        %541 = vmatpush2.msra.mxu0 0.0
        %542 = vmatprep.subr.mxu0 0.0
        %543 = vmatpush2.msra.mxu0 0.0
        %544 = vmatprep.subr.mxu0 0.0
        %545 = vmatpush2.msra.mxu0 0.0
        %546 = vmatprep.subr.mxu0 0.0
        %547 = vmatpush2.msra.mxu0 0.0
        %548 = vmatprep.subr.mxu0 0.0
        %549 = vmatpush2.msra.mxu0 0.0
        %550 = vmatprep.subr.mxu0 0.0
        %551 = vmatpush2.msra.mxu0 0.0
        %552 = vmatprep.subr.mxu0 0.0
        %553 = vmatpush2.msra.mxu0 0.0
        %554 = vmatprep.subr.mxu0 0.0
        %555 = vmatpush2.msra.mxu0 0.0
        %556 = vmatprep.subr.mxu0 0.0
        %557 = vmatpush2.msra.mxu0 0.0
        %558 = vmatprep.subr.mxu0 0.0
        %559 = vmatpush2.msra.mxu0 0.0
        %560 = vmatprep.subr.mxu0 0.0
        %561 = vmatpush2.msra.mxu0 0.0
        %562 = vmatprep.subr.mxu0 0.0
        %563 = vmatpush2.msra.mxu0 0.0
        %564 = vmatprep.mubr.f32.mxu0 0.0
        %565 = vmatmul.mubr.f32.gmra.mxu0 %v498
        %v566 = vpop.f32.mrf.mxu0
        %v567 = vadd.f32 0.0, %v566
        %v568 = vpop.f32.mrf.mxu0
        %569 = vdwg.mxu0
        %vm570 = vcmask 516096
        %v571 = vsel %vm570, %v567, 0.0
        %572 = vadd.xlane.f32.xlu0 %v571
        %v573 = vpop.xlane.xlu0 %572
        %v574 = vrcp.pop 64.0
        %v575 = vmul.f32 %v573, %v574
        %v576 = vsub.f32 %v567, %v575
        %v577 = vmul.f32 %v576, %v576
        %v578 = vsel %vm570, %v577, 0.0
        %579 = vadd.xlane.f32.xlu0 %v578
        %v580 = vpop.xlane.xlu0 %579
        %v581 = vmul.f32 %v580, %v574
        %v582 = vadd.f32 %v581, 1e-05
        %v583 = vrsqrt.pop %v582
        %v584 = vmul.f32 %v576, %v583
        %v585 = vmul.f32 %v584, %v308
        %v587 = vrot.slane %v308, 1
        %v589 = vadd.f32 %v585, %v587
        %v590 = vmax.f32 %v589, 0.0
        %v591 = vld [vmem:[%s4] sm:$0xff]
        %v592 = vld [vmem:[%s4 + $0x8] sm:$0xff]
        %v593 = vld [vmem:[%s4 + $0x10] sm:$0xff]
        %v594 = vld [vmem:[%s4 + $0x18] sm:$0xff]
        %v595 = vld [vmem:[%s4 + $0x20] sm:$0xff]
        %v596 = vld [vmem:[%s4 + $0x28] sm:$0xff]
        %v597 = vld [vmem:[%s4 + $0x30] sm:$0xff]
        %v598 = vld [vmem:[%s4 + $0x38] sm:$0xff]
        %vm599 = vcmask 523264
        %v601 = vsel %vm599, %v590, 0
        %603 = vmatprep.subr.mxu0 0.0
        %604 = vmatpush1.msra.mxu0 0.0
        %605 = vmatprep.subr.mxu0 0.0
        %606 = vmatpush1.msra.mxu0 0.0
        %607 = vmatprep.subr.mxu0 0.0
        %608 = vmatpush1.msra.mxu0 0.0
        %609 = vmatprep.subr.mxu0 0.0
        %610 = vmatpush1.msra.mxu0 0.0
        %611 = vmatprep.subr.mxu0 0.0
        %612 = vmatpush1.msra.mxu0 0.0
        %613 = vmatprep.subr.mxu0 0.0
        %614 = vmatpush1.msra.mxu0 0.0
        %615 = vmatprep.subr.mxu0 0.0
        %616 = vmatpush1.msra.mxu0 0.0
        %617 = vmatprep.subr.mxu0 0.0
        %618 = vmatpush1.msra.mxu0 0.0
        %619 = vmatprep.subr.mxu0 0.0
        %620 = vmatpush1.msra.mxu0 %v598
        %621 = vmatprep.subr.mxu0 0.0
        %622 = vmatpush1.msra.mxu0 %v597
        %623 = vmatprep.subr.mxu0 0.0
        %624 = vmatpush1.msra.mxu0 %v596
        %625 = vmatprep.subr.mxu0 0.0
        %626 = vmatpush1.msra.mxu0 %v595
        %627 = vmatprep.subr.mxu0 0.0
        %628 = vmatpush1.msra.mxu0 %v594
        %629 = vmatprep.subr.mxu0 0.0
        %630 = vmatpush1.msra.mxu0 %v593
        %631 = vmatprep.subr.mxu0 0.0
        %632 = vmatpush1.msra.mxu0 %v592
        %633 = vmatprep.subr.mxu0 0.0
        %634 = vmatpush1.msra.mxu0 %v591
        %635 = vmatprep.subr.mxu0 0.0
        %636 = vmatpush2.msra.mxu0 0.0
        %637 = vmatprep.subr.mxu0 0.0
        %638 = vmatpush2.msra.mxu0 0.0
        %639 = vmatprep.subr.mxu0 0.0
        %640 = vmatpush2.msra.mxu0 0.0
        %641 = vmatprep.subr.mxu0 0.0
        %642 = vmatpush2.msra.mxu0 0.0
        %643 = vmatprep.subr.mxu0 0.0
        %644 = vmatpush2.msra.mxu0 0.0
        %645 = vmatprep.subr.mxu0 0.0
        %646 = vmatpush2.msra.mxu0 0.0
        %647 = vmatprep.subr.mxu0 0.0
        %648 = vmatpush2.msra.mxu0 0.0
        %649 = vmatprep.subr.mxu0 0.0
        %650 = vmatpush2.msra.mxu0 0.0
        %651 = vmatprep.subr.mxu0 0.0
        %652 = vmatpush2.msra.mxu0 0.0
        %653 = vmatprep.subr.mxu0 0.0
        %654 = vmatpush2.msra.mxu0 0.0
        %655 = vmatprep.subr.mxu0 0.0
        %656 = vmatpush2.msra.mxu0 0.0
        %657 = vmatprep.subr.mxu0 0.0
        %658 = vmatpush2.msra.mxu0 0.0
        %659 = vmatprep.subr.mxu0 0.0
        %660 = vmatpush2.msra.mxu0 0.0
        %661 = vmatprep.subr.mxu0 0.0
        %662 = vmatpush2.msra.mxu0 0.0
        %663 = vmatprep.subr.mxu0 0.0
        %664 = vmatpush2.msra.mxu0 0.0
        %665 = vmatprep.subr.mxu0 0.0
        %666 = vmatpush2.msra.mxu0 0.0
        %667 = vmatprep.mubr.f32.mxu0 0.0
        %668 = vmatmul.mubr.f32.gmra.mxu0 %v601
        %v669 = vpop.f32.mrf.mxu0
        %v670 = vadd.f32 0.0, %v669
        %v671 = vpop.f32.mrf.mxu0
        %672 = vdwg.mxu0
        %v673 = vsel %vm472, %v670, 0.0
        %674 = vadd.xlane.f32.xlu0 %v673
        %v675 = vpop.xlane.xlu0 %674
        %v676 = vmul.f32 %v675, %v476
        %v677 = vsub.f32 %v670, %v676
        %v678 = vmul.f32 %v677, %v677
        %v679 = vsel %vm472, %v678, 0.0
        %680 = vadd.xlane.f32.xlu0 %v679
        %v681 = vpop.xlane.xlu0 %680
        %v682 = vmul.f32 %v681, %v476
        %v683 = vadd.f32 %v682, 1e-05
        %v684 = vrsqrt.pop %v683
        %v685 = vmul.f32 %v677, %v684
        %v686 = vrot.slane %v307, 2
        %v688 = vmul.f32 %v685, %v686
        %v689 = vrot.slane %v307, 3
        %v691 = vadd.f32 %v688, %v689
        %v692 = vmax.f32 %v691, 0.0
        %v693 = vsel %vm472, %v692, 0.0
        %694 = vadd.xlane.f32.xlu0 %v693
        %v695 = vpop.xlane.xlu0 %694
        %v696 = vmul.f32 %v695, %v476
        %v697 = vsub.f32 %v692, %v696
        %v698 = vmul.f32 %v697, %v697
        %v699 = vsel %vm472, %v698, 0.0
        %700 = vadd.xlane.f32.xlu0 %v699
        %v701 = vpop.xlane.xlu0 %700
        %v702 = vmul.f32 %v701, %v476
        %v703 = vadd.f32 %v702, 1e-05
        %v704 = vrsqrt.pop %v703
        %v705 = vmul.f32 %v697, %v704
        %v706 = vrot.slane %v307, 4
        %v708 = vmul.f32 %v705, %v706
        %v709 = vrot.slane %v307, 5
        %v711 = vadd.f32 %v708, %v709
        %v712 = vadd.f32 %v692, %v711
        %v713 = vlaneseq
        %v714 = vshrl.u32 %v713, 7
        %v715 = vsub.s32 0, %v714
        %v716 = vrot.slane %v712, %v715
        %717 = vst.msk [vmem:[%s306] sm:$0xff] %vm310, %v716
        %s718 = sand.u32 %s185, 1
        %s719 = scalar_lea.sflag [#allocation4], %s718
        %s720 = sand.u32 %s185, 1
        %s721 = smul.addr %s720, 8
        %s722 = scalar_lea.vmem [#allocation7], %s721
        // Predicated region
        $region57: #{tpu_custom_call.1} parent=47 // pred_check
          %p723 = pneg %p195
        $region58: #{tpu_custom_call.1} parent=47 // pred_check_branch
          %725 = sbr.rel (%p723) target = $region60
        $region59: #{tpu_custom_call.1} parent=47 // pred_region
          %s727 = ssub.s32 128, 128
          %728 = vsyncadd %s719, %s727
          %s729 = smul.addr %s25, 128
          %s730 = scalar_lea.hbm %s7, %s729
          %s732 = sshll.u32 %s722, 4
          %s733 = int_to_ptr.vmem [resolvable:$true] %s732
          %735 = dma.vmem_to_hbm [thread:$0]  %s733, 128, %s730, %s719
        $region60: #{tpu_custom_call.1} parent=47 // pred_fallthru
          _
      $region48: #{tpu_custom_call.1} parent=5 // pred_fallthru
        _
      %p736 = scmp.le.s32.totalorder 2, %s20
      // Predicated region
      $region61: #{tpu_custom_call.1} parent=5 // pred_check
        %p737 = pneg %p736
      $region62: #{tpu_custom_call.1} parent=5 // pred_check_branch
        %739 = sbr.rel (%p737) target = $region64
      $region63: #{tpu_custom_call.1} parent=5 // pred_region
        %s740 = ssub.s32 %s20, 2
        // Predicated region
        $region65: #{tpu_custom_call.1} parent=63 // pred_check
          %p741 = pneg %p201
        $region66: #{tpu_custom_call.1} parent=63 // pred_check_branch
          %743 = sbr.rel (%p741) target = $region68
        $region67: #{tpu_custom_call.1} parent=63 // pred_region
          %s744 = sand.u32 %s186, 1
          %s745 = scalar_lea.sflag [#allocation4], %s744
          %s746 = sand.u32 %s186, 1
          %s747 = smul.addr %s746, 8
          %s748 = scalar_lea.vmem [#allocation7], %s747
          %749 = dma.done %s745, 128
        $region68: #{tpu_custom_call.1} parent=63 // pred_fallthru
          _
      $region64: #{tpu_custom_call.1} parent=5 // pred_fallthru
        _
    $region6: #{tpu_custom_call.1} parent=1 // loop_footer
      %s24 = sadd.s32 1, %s20
    $region7: #{tpu_custom_call.1} parent=1 // loop_footer_branch
      %19 = sbr.rel target = $region3
    $region8: #{tpu_custom_call.1} parent=1 // loop_exit
      _
    %750 = vsyncpa [#allocation3], 1
    %s751 = scalar_lea.sflag [#allocation3], 1
    %752 = vsyncpa %s751, 1
    %753 = vsyncpa [#allocation6], 1
    %754 = vsyncpa [#allocation4], 1
    %s755 = scalar_lea.sflag [#allocation4], 1
    %756 = vsyncpa %s755, 1

// kernel: tpu_custom_call.1
$region0: #{tpu_custom_call.1}
  #allocation0 [shape = 'u32[]', space=smem, size = 0x4, offset = 0x4, fixed_abs, tag = 'smem constant byte address 0x4 - core index']
  #allocation1 [shape = 'u32[144,128]{1,0:T(1,128)}', space=vmem, size = 0x12000, scoped, tag = 'internal scratch']
  %s0 = inlined_call_operand.hbm [shape: f32[2,8,32], index: 0, kind: input, shape index: {}]
  %s1 = inlined_call_operand.vmem [shape: f32[32,32], index: 1, kind: input, shape index: {}]
  %s2 = inlined_call_operand.vmem [shape: f32[32,32], index: 2, kind: input, shape index: {}]
  %s3 = inlined_call_operand.vmem [shape: f32[32,64], index: 3, kind: input, shape index: {}]
  %s4 = inlined_call_operand.vmem [shape: f32[64,32], index: 4, kind: input, shape index: {}]
  %s5 = inlined_call_operand.vmem [shape: f32[8,32], index: 5, kind: input, shape index: {}]
  %s6 = inlined_call_operand.hbm [shape: f32[8,64], index: 6, kind: input, shape index: {}]
  %s7 = inlined_call_operand.hbm [shape: f32[2,8,32], index: 7, kind: output, shape index: {}]
  %s8 = sld [smem:[#allocation0]]
  $region69: #{tpu_custom_call.1} parent=0
    _
  %s10 = ssub.s32 1, %s8
  %s11 = scalar_select 0, %s10, %s8
  $region1: #{tpu_custom_call.1} parent=0
    #allocation2 [shape = 'u8[8192]{0}', space=vmem, size = 0x2000, scoped, tag = 'input window, operand 0']
    #allocation3 [shape = 's32[2]{0}', space=sflag, size = 0x8, scoped, tag = 'scoped memory for tpu_custom_call.1']
    #allocation4 [shape = 's32[2]{0}', space=sflag, size = 0x8, scoped, tag = 'scoped memory for tpu_custom_call.1']
    #allocation5 [shape = 'u8[4096]{0}', space=vmem, size = 0x1000, scoped, tag = 'input window, operand 6, single buffered']
    #allocation6 [shape = 's32[1]{0}', space=sflag, size = 0x4, scoped, tag = 'scoped memory for tpu_custom_call.1']
    #allocation7 [shape = 'u8[8192]{0}', space=vmem, size = 0x2000, scoped, tag = 'output window, operand 0']
    %12 = vsyncpa [#allocation3], 0
    %s13 = scalar_lea.sflag [#allocation3], 1
    %14 = vsyncpa %s13, 0
    %15 = vsyncpa [#allocation6], 0
    %16 = vsyncpa [#allocation4], 0
    %s17 = scalar_lea.sflag [#allocation4], 1
    %18 = vsyncpa %s17, 0
    loop: start=0, step=1, limit=4
    $region2: #{tpu_custom_call.1} parent=1 // loop_pre_header
      _
    $region3: #{tpu_custom_call.1} parent=1 // loop_header
      %s20 = sphi 0, %s24
      %p21 = scmp.ge.s32.totalorder %s20, 4
      %s30 = sphi 0, %s32
      %s33 = sphi 0, %s30
      %s34 = sphi 0, %s33
      %s50 = sphi 0, %s34
      %s54 = sphi 0, %s54
      %s56 = sphi 0, %s54
      %s57 = sphi 0, %s56
      %s71 = sphi 0, %s57
      %s75 = sphi 0, %s75
      %s77 = sphi 0, %s75
      %s78 = sphi 0, %s77
      %s92 = sphi 0, %s78
      %s96 = sphi 0, %s96
      %s98 = sphi 0, %s96
      %s99 = sphi 0, %s98
      %s113 = sphi 0, %s99
      %s117 = sphi 0, %s117
      %s119 = sphi 0, %s117
      %s120 = sphi 0, %s119
      %s134 = sphi 0, %s120
      %s138 = sphi 0, %s138
      %s140 = sphi 0, %s138
      %s141 = sphi 0, %s140
      %s155 = sphi 0, %s141
      %s159 = sphi 0, %s159
      %s161 = sphi 0, %s159
      %s162 = sphi 0, %s161
      %s176 = sphi 0, %s162
      %s182 = sphi 0, %s184
      %s185 = sphi 0, %s182
      %s186 = sphi 0, %s185
      %s202 = sphi 0, %s186
    $region4: #{tpu_custom_call.1} parent=1 // loop_header_branch
      %23 = sbr.rel (%p21) target = $region8
    $region5: #{tpu_custom_call.1} parent=1 // loop_body
      %s25 = ssub.s32 %s20, 1
      %s26 = ssub.s32 %s20, 2
      %s27 = sadd.s32 %s20, 1
      %s28 = ssub.s32 %s20, %s27
      %p29 = scmp.eq.s32.totalorder %s28, 0
      %s31 = sadd.s32 %s30, 1
      %s32 = scalar_select %p29, %s30, %s31
      %p35 = pneg %p29
      %p36 = scmp.eq.s32.totalorder %s20, 1
      %p37 = por %p35, %p36
      %p38 = scmp.ne.s32.totalorder %s30, %s33
      %p39 = scmp.eq.s32.totalorder %s20, 0
      %p40 = por %p38, %p39
      %p41 = scmp.ne.s32.totalorder %s30, %s33
      %p42 = scmp.eq.s32.totalorder %s25, 1
      %p43 = por %p41, %p42
      %p44 = scmp.ne.s32.totalorder %s33, %s34
      %p45 = scmp.eq.s32.totalorder %s25, 0
      %p46 = por %p44, %p45
      %p47 = scmp.ne.s32.totalorder %s33, %s34
      %p48 = scmp.eq.s32.totalorder %s26, 1
      %p49 = por %p47, %p48
      %p51 = scmp.ne.s32.totalorder %s34, %s50
      %p52 = scmp.eq.s32.totalorder %s26, 0
      %p53 = por %p51, %p52
      %s55 = sadd.s32 %s54, 1
      %p58 = scmp.eq.s32.totalorder %s20, 1
      %p59 = scmp.ne.s32.totalorder %s54, %s56
      %p60 = scmp.eq.s32.totalorder %s20, 0
      %p61 = por %p59, %p60
      %p62 = scmp.ne.s32.totalorder %s54, %s56
      %p63 = scmp.eq.s32.totalorder %s25, 1
      %p64 = por %p62, %p63
      %p65 = scmp.ne.s32.totalorder %s56, %s57
      %p66 = scmp.eq.s32.totalorder %s25, 0
      %p67 = por %p65, %p66
      %p68 = scmp.ne.s32.totalorder %s56, %s57
      %p69 = scmp.eq.s32.totalorder %s26, 1
      %p70 = por %p68, %p69
      %p72 = scmp.ne.s32.totalorder %s57, %s71
      %p73 = scmp.eq.s32.totalorder %s26, 0
      %p74 = por %p72, %p73
      %s76 = sadd.s32 %s75, 1
      %p79 = scmp.eq.s32.totalorder %s20, 1
      %p80 = scmp.ne.s32.totalorder %s75, %s77
      %p81 = scmp.eq.s32.totalorder %s20, 0
      %p82 = por %p80, %p81
      %p83 = scmp.ne.s32.totalorder %s75, %s77
      %p84 = scmp.eq.s32.totalorder %s25, 1
      %p85 = por %p83, %p84
      %p86 = scmp.ne.s32.totalorder %s77, %s78
      %p87 = scmp.eq.s32.totalorder %s25, 0
      %p88 = por %p86, %p87
      %p89 = scmp.ne.s32.totalorder %s77, %s78
      %p90 = scmp.eq.s32.totalorder %s26, 1
      %p91 = por %p89, %p90
      %p93 = scmp.ne.s32.totalorder %s78, %s92
      %p94 = scmp.eq.s32.totalorder %s26, 0
      %p95 = por %p93, %p94
      %s97 = sadd.s32 %s96, 1
      %p100 = scmp.eq.s32.totalorder %s20, 1
      %p101 = scmp.ne.s32.totalorder %s96, %s98
      %p102 = scmp.eq.s32.totalorder %s20, 0
      %p103 = por %p101, %p102
      %p104 = scmp.ne.s32.totalorder %s96, %s98
      %p105 = scmp.eq.s32.totalorder %s25, 1
      %p106 = por %p104, %p105
      %p107 = scmp.ne.s32.totalorder %s98, %s99
      %p108 = scmp.eq.s32.totalorder %s25, 0
      %p109 = por %p107, %p108
      %p110 = scmp.ne.s32.totalorder %s98, %s99
      %p111 = scmp.eq.s32.totalorder %s26, 1
      %p112 = por %p110, %p111
      %p114 = scmp.ne.s32.totalorder %s99, %s113
      %p115 = scmp.eq.s32.totalorder %s26, 0
      %p116 = por %p114, %p115
      %s118 = sadd.s32 %s117, 1
      %p121 = scmp.eq.s32.totalorder %s20, 1
      %p122 = scmp.ne.s32.totalorder %s117, %s119
      %p123 = scmp.eq.s32.totalorder %s20, 0
      %p124 = por %p122, %p123
      %p125 = scmp.ne.s32.totalorder %s117, %s119
      %p126 = scmp.eq.s32.totalorder %s25, 1
      %p127 = por %p125, %p126
      %p128 = scmp.ne.s32.totalorder %s119, %s120
      %p129 = scmp.eq.s32.totalorder %s25, 0
      %p130 = por %p128, %p129
      %p131 = scmp.ne.s32.totalorder %s119, %s120
      %p132 = scmp.eq.s32.totalorder %s26, 1
      %p133 = por %p131, %p132
      %p135 = scmp.ne.s32.totalorder %s120, %s134
      %p136 = scmp.eq.s32.totalorder %s26, 0
      %p137 = por %p135, %p136
      %s139 = sadd.s32 %s138, 1
      %p142 = scmp.eq.s32.totalorder %s20, 1
      %p143 = scmp.ne.s32.totalorder %s138, %s140
      %p144 = scmp.eq.s32.totalorder %s20, 0
      %p145 = por %p143, %p144
      %p146 = scmp.ne.s32.totalorder %s138, %s140
      %p147 = scmp.eq.s32.totalorder %s25, 1
      %p148 = por %p146, %p147
      %p149 = scmp.ne.s32.totalorder %s140, %s141
      %p150 = scmp.eq.s32.totalorder %s25, 0
      %p151 = por %p149, %p150
      %p152 = scmp.ne.s32.totalorder %s140, %s141
      %p153 = scmp.eq.s32.totalorder %s26, 1
      %p154 = por %p152, %p153
      %p156 = scmp.ne.s32.totalorder %s141, %s155
      %p157 = scmp.eq.s32.totalorder %s26, 0
      %p158 = por %p156, %p157
      %s160 = sadd.s32 %s159, 1
      %p163 = scmp.eq.s32.totalorder %s20, 1
      %p164 = scmp.ne.s32.totalorder %s159, %s161
      %p165 = scmp.eq.s32.totalorder %s20, 0
      %p166 = por %p164, %p165
      %p167 = scmp.ne.s32.totalorder %s159, %s161
      %p168 = scmp.eq.s32.totalorder %s25, 1
      %p169 = por %p167, %p168
      %p170 = scmp.ne.s32.totalorder %s161, %s162
      %p171 = scmp.eq.s32.totalorder %s25, 0
      %p172 = por %p170, %p171
      %p173 = scmp.ne.s32.totalorder %s161, %s162
      %p174 = scmp.eq.s32.totalorder %s26, 1
      %p175 = por %p173, %p174
      %p177 = scmp.ne.s32.totalorder %s162, %s176
      %p178 = scmp.eq.s32.totalorder %s26, 0
      %p179 = por %p177, %p178
      %s180 = ssub.s32 %s20, %s27
      %p181 = scmp.eq.s32.totalorder %s180, 0
      %s183 = sadd.s32 %s182, 1
      %s184 = scalar_select %p181, %s182, %s183
      %p187 = pneg %p181
      %p188 = scmp.eq.s32.totalorder %s20, 1
      %p189 = por %p187, %p188
      %p190 = scmp.ne.s32.totalorder %s182, %s185
      %p191 = scmp.eq.s32.totalorder %s20, 0
      %p192 = por %p190, %p191
      %p193 = scmp.ne.s32.totalorder %s182, %s185
      %p194 = scmp.eq.s32.totalorder %s25, 1
      %p195 = por %p193, %p194
      %p196 = scmp.ne.s32.totalorder %s185, %s186
      %p197 = scmp.eq.s32.totalorder %s25, 0
      %p198 = por %p196, %p197
      %p199 = scmp.ne.s32.totalorder %s185, %s186
      %p200 = scmp.eq.s32.totalorder %s26, 1
      %p201 = por %p199, %p200
      %p203 = scmp.ne.s32.totalorder %s186, %s202
      %p204 = scmp.eq.s32.totalorder %s26, 0
      %p205 = por %p203, %p204
      %p206 = scmp.le.s32.totalorder 1, %s20
      %p207 = scmp.lt.s32.totalorder %s20, 3
      %p208 = pnand %p206, %p207
      %p209 = pneg %p208
      // Predicated region
      $region9: #{tpu_custom_call.1} parent=5 // pred_check
        _
      $region10: #{tpu_custom_call.1} parent=5 // pred_check_branch
        %211 = sbr.rel (%p208) target = $region12
      $region11: #{tpu_custom_call.1} parent=5 // pred_region
        %s212 = ssub.s32 %s20, 1
        // Predicated region
        $region13: #{tpu_custom_call.1} parent=11 // pred_check
          %p213 = pneg %p67
        $region14: #{tpu_custom_call.1} parent=11 // pred_check_branch
          %215 = sbr.rel (%p213) target = $region16
        $region15: #{tpu_custom_call.1} parent=11 // pred_region
          _
        $region16: #{tpu_custom_call.1} parent=11 // pred_fallthru
          _
        // Predicated region
        $region17: #{tpu_custom_call.1} parent=11 // pred_check
          %p216 = pneg %p88
        $region18: #{tpu_custom_call.1} parent=11 // pred_check_branch
          %218 = sbr.rel (%p216) target = $region20
        $region19: #{tpu_custom_call.1} parent=11 // pred_region
          _
        $region20: #{tpu_custom_call.1} parent=11 // pred_fallthru
          _
        // Predicated region
        $region21: #{tpu_custom_call.1} parent=11 // pred_check
          %p219 = pneg %p109
        $region22: #{tpu_custom_call.1} parent=11 // pred_check_branch
          %221 = sbr.rel (%p219) target = $region24
        $region23: #{tpu_custom_call.1} parent=11 // pred_region
          _
        $region24: #{tpu_custom_call.1} parent=11 // pred_fallthru
          _
        // Predicated region
        $region25: #{tpu_custom_call.1} parent=11 // pred_check
          %p222 = pneg %p130
        $region26: #{tpu_custom_call.1} parent=11 // pred_check_branch
          %224 = sbr.rel (%p222) target = $region28
        $region27: #{tpu_custom_call.1} parent=11 // pred_region
          _
        $region28: #{tpu_custom_call.1} parent=11 // pred_fallthru
          _
        // Predicated region
        $region29: #{tpu_custom_call.1} parent=11 // pred_check
          %p225 = pneg %p151
        $region30: #{tpu_custom_call.1} parent=11 // pred_check_branch
          %227 = sbr.rel (%p225) target = $region32
        $region31: #{tpu_custom_call.1} parent=11 // pred_region
          _
        $region32: #{tpu_custom_call.1} parent=11 // pred_fallthru
          _
        // Predicated region
        $region33: #{tpu_custom_call.1} parent=11 // pred_check
          %p228 = pneg %p172
        $region34: #{tpu_custom_call.1} parent=11 // pred_check_branch
          %230 = sbr.rel (%p228) target = $region36
        $region35: #{tpu_custom_call.1} parent=11 // pred_region
          %s232 = ssub.s32 128, 128
          %233 = vsyncadd [#allocation6], %s232
          %s235 = sshll.u32 [#allocation5], 4
          %s236 = int_to_ptr.vmem [resolvable:$true] %s235
          %238 = dma.hbm_to_vmem [thread:$0]  %s6, 128, %s236, [#allocation6]
        $region36: #{tpu_custom_call.1} parent=11 // pred_fallthru
          _
      $region12: #{tpu_custom_call.1} parent=5 // pred_fallthru
        _
      %p239 = scmp.lt.s32.totalorder %s20, 2
      // Predicated region
      $region37: #{tpu_custom_call.1} parent=5 // pred_check
        %p240 = pneg %p239
      $region38: #{tpu_custom_call.1} parent=5 // pred_check_branch
        %242 = sbr.rel (%p240) target = $region40
      $region39: #{tpu_custom_call.1} parent=5 // pred_region
        // Predicated region
        $region41: #{tpu_custom_call.1} parent=39 // pred_check
          %p243 = pneg %p40
        $region42: #{tpu_custom_call.1} parent=39 // pred_check_branch
          %245 = sbr.rel (%p243) target = $region44
        $region43: #{tpu_custom_call.1} parent=39 // pred_region
          %s246 = sand.u32 %s30, 1
          %s247 = scalar_lea.sflag [#allocation3], %s246
          %s248 = sand.u32 %s30, 1
          %s249 = smul.addr %s248, 8
          %s250 = scalar_lea.vmem [#allocation2], %s249
          %s252 = ssub.s32 128, 128
          %253 = vsyncadd %s247, %s252
          %s254 = smul.addr %s20, 128
          %s255 = scalar_lea.hbm %s0, %s254
          %s257 = sshll.u32 %s250, 4
          %s258 = int_to_ptr.vmem [resolvable:$true] %s257
          %260 = dma.hbm_to_vmem [thread:$0]  %s255, 128, %s258, %s247
        $region44: #{tpu_custom_call.1} parent=39 // pred_fallthru
          _
      $region40: #{tpu_custom_call.1} parent=5 // pred_fallthru
        _
      %p261 = scmp.le.s32.totalorder 1, %s20
      %p262 = scmp.lt.s32.totalorder %s20, 3
      %p263 = pnand %p261, %p262
      %p264 = pneg %p263
      // Predicated region
      $region45: #{tpu_custom_call.1} parent=5 // pred_check
        _
      $region46: #{tpu_custom_call.1} parent=5 // pred_check_branch
        %266 = sbr.rel (%p263) target = $region48
      $region47: #{tpu_custom_call.1} parent=5 // pred_region
        %s267 = ssub.s32 %s20, 1
        %s268 = sand.u32 %s33, 1
        %s269 = scalar_lea.sflag [#allocation3], %s268
        %s270 = sand.u32 %s33, 1
        %s271 = smul.addr %s270, 8
        %s272 = scalar_lea.vmem [#allocation2], %s271
        // Predicated region
        $region49: #{tpu_custom_call.1} parent=47 // pred_check
          %p273 = pneg %p46
        $region50: #{tpu_custom_call.1} parent=47 // pred_check_branch
          %275 = sbr.rel (%p273) target = $region52
        $region51: #{tpu_custom_call.1} parent=47 // pred_region
          %276 = dma.done %s269, 128
        $region52: #{tpu_custom_call.1} parent=47 // pred_fallthru
          _
        // Predicated region
        $region53: #{tpu_custom_call.1} parent=47 // pred_check
          %p277 = pneg %p172
        $region54: #{tpu_custom_call.1} parent=47 // pred_check_branch
          %279 = sbr.rel (%p277) target = $region56
        $region55: #{tpu_custom_call.1} parent=47 // pred_region
          %280 = dma.done [#allocation6], 128
        $region56: #{tpu_custom_call.1} parent=47 // pred_fallthru
          _
        %s281 = sand.u32 %s33, 1
        %s282 = scalar_lea.sflag [#allocation3], %s281
        %s283 = sand.u32 %s33, 1
        %s284 = smul.addr %s283, 8
        %s285 = scalar_lea.vmem [#allocation2], %s284
        %p286 = pneg %p46
        %p287 = pneg %p43
        %p288 = pneg %p67
        %p289 = pneg %p64
        %p290 = pneg %p88
        %p291 = pneg %p85
        %p292 = pneg %p109
        %p293 = pneg %p106
        %p294 = pneg %p130
        %p295 = pneg %p127
        %p296 = pneg %p151
        %p297 = pneg %p148
        %p298 = pneg %p172
        %p299 = pneg %p169
        %p300 = pneg %p198
        %p301 = pneg %p195
        %s302 = sand.u32 %s185, 1
        %s303 = scalar_lea.sflag [#allocation4], %s302
        %s304 = sand.u32 %s185, 1
        %s305 = smul.addr %s304, 8
        %s306 = scalar_lea.vmem [#allocation7], %s305
        %v307 = vld [vmem:[%s5] sm:$0xff]
        %v308 = vld [vmem:[#allocation5] sm:$0xff]
        %v309 = vld [vmem:[%s272] sm:$0xff]
        %vm310 = vcmask 261120
        %v311 = vsel %vm310, %v309, 0.0
        %v312 = vrot.slane %v311, 4
        %v313 = vadd.f32 %v311, %v312
        %v314 = vrot.slane %v313, 2
        %v315 = vadd.f32 %v313, %v314
        %v316 = vrot.slane %v315, 1
        %v317 = vadd.f32 %v315, %v316
        %v318 = vld [vmem:[%s1] sm:$0xff]
        %v319 = vld [vmem:[%s1 + $0x8] sm:$0xff]
        %v320 = vld [vmem:[%s1 + $0x10] sm:$0xff]
        %v321 = vld [vmem:[%s1 + $0x18] sm:$0xff]
        %v323 = vsel %vm310, %v317, 0
        %325 = vmatprep.subr.mxu0 0.0
        %326 = vmatpush1.msra.mxu0 0.0
        %327 = vmatprep.subr.mxu0 0.0
        %328 = vmatpush1.msra.mxu0 0.0
        %329 = vmatprep.subr.mxu0 0.0
        %330 = vmatpush1.msra.mxu0 0.0
        %331 = vmatprep.subr.mxu0 0.0
        %332 = vmatpush1.msra.mxu0 0.0
        %333 = vmatprep.subr.mxu0 0.0
        %334 = vmatpush1.msra.mxu0 0.0
        %335 = vmatprep.subr.mxu0 0.0
        %336 = vmatpush1.msra.mxu0 0.0
        %337 = vmatprep.subr.mxu0 0.0
        %338 = vmatpush1.msra.mxu0 0.0
        %339 = vmatprep.subr.mxu0 0.0
        %340 = vmatpush1.msra.mxu0 0.0
        %341 = vmatprep.subr.mxu0 0.0
        %342 = vmatpush1.msra.mxu0 0.0
        %343 = vmatprep.subr.mxu0 0.0
        %344 = vmatpush1.msra.mxu0 0.0
        %345 = vmatprep.subr.mxu0 0.0
        %346 = vmatpush1.msra.mxu0 0.0
        %347 = vmatprep.subr.mxu0 0.0
        %348 = vmatpush1.msra.mxu0 0.0
        %349 = vmatprep.subr.mxu0 0.0
        %350 = vmatpush1.msra.mxu0 %v321
        %351 = vmatprep.subr.mxu0 0.0
        %352 = vmatpush1.msra.mxu0 %v320
        %353 = vmatprep.subr.mxu0 0.0
        %354 = vmatpush1.msra.mxu0 %v319
        %355 = vmatprep.subr.mxu0 0.0
        %356 = vmatpush1.msra.mxu0 %v318
        %357 = vmatprep.subr.mxu0 0.0
        %358 = vmatpush2.msra.mxu0 0.0
        %359 = vmatprep.subr.mxu0 0.0
        %360 = vmatpush2.msra.mxu0 0.0
        %361 = vmatprep.subr.mxu0 0.0
        %362 = vmatpush2.msra.mxu0 0.0
        %363 = vmatprep.subr.mxu0 0.0
        %364 = vmatpush2.msra.mxu0 0.0
        %365 = vmatprep.subr.mxu0 0.0
        %366 = vmatpush2.msra.mxu0 0.0
        %367 = vmatprep.subr.mxu0 0.0
        %368 = vmatpush2.msra.mxu0 0.0
        %369 = vmatprep.subr.mxu0 0.0
        %370 = vmatpush2.msra.mxu0 0.0
        %371 = vmatprep.subr.mxu0 0.0
        %372 = vmatpush2.msra.mxu0 0.0
        %373 = vmatprep.subr.mxu0 0.0
        %374 = vmatpush2.msra.mxu0 0.0
        %375 = vmatprep.subr.mxu0 0.0
        %376 = vmatpush2.msra.mxu0 0.0
        %377 = vmatprep.subr.mxu0 0.0
        %378 = vmatpush2.msra.mxu0 0.0
        %379 = vmatprep.subr.mxu0 0.0
        %380 = vmatpush2.msra.mxu0 0.0
        %381 = vmatprep.subr.mxu0 0.0
        %382 = vmatpush2.msra.mxu0 0.0
        %383 = vmatprep.subr.mxu0 0.0
        %384 = vmatpush2.msra.mxu0 0.0
        %385 = vmatprep.subr.mxu0 0.0
        %386 = vmatpush2.msra.mxu0 0.0
        %387 = vmatprep.subr.mxu0 0.0
        %388 = vmatpush2.msra.mxu0 0.0
        %389 = vmatprep.mubr.f32.mxu0 0.0
        %390 = vmatmul.mubr.f32.gmra.mxu0 %v323
        %v391 = vpop.f32.mrf.mxu0
        %v392 = vadd.f32 0.0, %v391
        %v393 = vpop.f32.mrf.mxu0
        %394 = vdwg.mxu0
        %v395 = vld [vmem:[%s2] sm:$0xff]
        %v396 = vld [vmem:[%s2 + $0x8] sm:$0xff]
        %v397 = vld [vmem:[%s2 + $0x10] sm:$0xff]
        %v398 = vld [vmem:[%s2 + $0x18] sm:$0xff]
        %v400 = vsel %vm310, %v392, 0
        %402 = vmatprep.subr.mxu0 0.0
        %403 = vmatpush1.msra.mxu0 0.0
        %404 = vmatprep.subr.mxu0 0.0
        %405 = vmatpush1.msra.mxu0 0.0
        %406 = vmatprep.subr.mxu0 0.0
        %407 = vmatpush1.msra.mxu0 0.0
        %408 = vmatprep.subr.mxu0 0.0
        %409 = vmatpush1.msra.mxu0 0.0
        %410 = vmatprep.subr.mxu0 0.0
        %411 = vmatpush1.msra.mxu0 0.0
        %412 = vmatprep.subr.mxu0 0.0
        %413 = vmatpush1.msra.mxu0 0.0
        %414 = vmatprep.subr.mxu0 0.0
        %415 = vmatpush1.msra.mxu0 0.0
        %416 = vmatprep.subr.mxu0 0.0
        %417 = vmatpush1.msra.mxu0 0.0
        %418 = vmatprep.subr.mxu0 0.0
        %419 = vmatpush1.msra.mxu0 0.0
        %420 = vmatprep.subr.mxu0 0.0
        %421 = vmatpush1.msra.mxu0 0.0
        %422 = vmatprep.subr.mxu0 0.0
        %423 = vmatpush1.msra.mxu0 0.0
        %424 = vmatprep.subr.mxu0 0.0
        %425 = vmatpush1.msra.mxu0 0.0
        %426 = vmatprep.subr.mxu0 0.0
        %427 = vmatpush1.msra.mxu0 %v398
        %428 = vmatprep.subr.mxu0 0.0
        %429 = vmatpush1.msra.mxu0 %v397
        %430 = vmatprep.subr.mxu0 0.0
        %431 = vmatpush1.msra.mxu0 %v396
        %432 = vmatprep.subr.mxu0 0.0
        %433 = vmatpush1.msra.mxu0 %v395
        %434 = vmatprep.subr.mxu0 0.0
        %435 = vmatpush2.msra.mxu0 0.0
        %436 = vmatprep.subr.mxu0 0.0
        %437 = vmatpush2.msra.mxu0 0.0
        %438 = vmatprep.subr.mxu0 0.0
        %439 = vmatpush2.msra.mxu0 0.0
        %440 = vmatprep.subr.mxu0 0.0
        %441 = vmatpush2.msra.mxu0 0.0
        %442 = vmatprep.subr.mxu0 0.0
        %443 = vmatpush2.msra.mxu0 0.0
        %444 = vmatprep.subr.mxu0 0.0
        %445 = vmatpush2.msra.mxu0 0.0
        %446 = vmatprep.subr.mxu0 0.0
        %447 = vmatpush2.msra.mxu0 0.0
        %448 = vmatprep.subr.mxu0 0.0
        %449 = vmatpush2.msra.mxu0 0.0
        %450 = vmatprep.subr.mxu0 0.0
        %451 = vmatpush2.msra.mxu0 0.0
        %452 = vmatprep.subr.mxu0 0.0
        %453 = vmatpush2.msra.mxu0 0.0
        %454 = vmatprep.subr.mxu0 0.0
        %455 = vmatpush2.msra.mxu0 0.0
        %456 = vmatprep.subr.mxu0 0.0
        %457 = vmatpush2.msra.mxu0 0.0
        %458 = vmatprep.subr.mxu0 0.0
        %459 = vmatpush2.msra.mxu0 0.0
        %460 = vmatprep.subr.mxu0 0.0
        %461 = vmatpush2.msra.mxu0 0.0
        %462 = vmatprep.subr.mxu0 0.0
        %463 = vmatpush2.msra.mxu0 0.0
        %464 = vmatprep.subr.mxu0 0.0
        %465 = vmatpush2.msra.mxu0 0.0
        %466 = vmatprep.mubr.f32.mxu0 0.0
        %467 = vmatmul.mubr.f32.gmra.mxu0 %v400
        %v468 = vpop.f32.mrf.mxu0
        %v469 = vadd.f32 0.0, %v468
        %v470 = vpop.f32.mrf.mxu0
        %471 = vdwg.mxu0
        %vm472 = vcmask 253952
        %v473 = vsel %vm472, %v469, 0.0
        %474 = vadd.xlane.f32.xlu0 %v473
        %v475 = vpop.xlane.xlu0 %474
        %v476 = vrcp.pop 32.0
        %v477 = vmul.f32 %v475, %v476
        %v478 = vsub.f32 %v469, %v477
        %v479 = vmul.f32 %v478, %v478
        %v480 = vsel %vm472, %v479, 0.0
        %481 = vadd.xlane.f32.xlu0 %v480
        %v482 = vpop.xlane.xlu0 %481
        %v483 = vmul.f32 %v482, %v476
        %v484 = vadd.f32 %v483, 1e-05
        %v485 = vrsqrt.pop %v484
        %v486 = vmul.f32 %v478, %v485
        %v487 = vmul.f32 %v486, %v307
        %v489 = vrot.slane %v307, 1
        %v491 = vadd.f32 %v487, %v489
        %v492 = vadd.f32 %v469, %v491
        %v493 = vld [vmem:[%s3] sm:$0xff]
        %v494 = vld [vmem:[%s3 + $0x8] sm:$0xff]
        %v495 = vld [vmem:[%s3 + $0x10] sm:$0xff]
        %v496 = vld [vmem:[%s3 + $0x18] sm:$0xff]
        %v498 = vsel %vm310, %v492, 0
        %500 = vmatprep.subr.mxu0 0.0
        %501 = vmatpush1.msra.mxu0 0.0
        %502 = vmatprep.subr.mxu0 0.0
        %503 = vmatpush1.msra.mxu0 0.0
        %504 = vmatprep.subr.mxu0 0.0
        %505 = vmatpush1.msra.mxu0 0.0
        %506 = vmatprep.subr.mxu0 0.0
        %507 = vmatpush1.msra.mxu0 0.0
        %508 = vmatprep.subr.mxu0 0.0
        %509 = vmatpush1.msra.mxu0 0.0
        %510 = vmatprep.subr.mxu0 0.0
        %511 = vmatpush1.msra.mxu0 0.0
        %512 = vmatprep.subr.mxu0 0.0
        %513 = vmatpush1.msra.mxu0 0.0
        %514 = vmatprep.subr.mxu0 0.0
        %515 = vmatpush1.msra.mxu0 0.0
        %516 = vmatprep.subr.mxu0 0.0
        %517 = vmatpush1.msra.mxu0 0.0
        %518 = vmatprep.subr.mxu0 0.0
        %519 = vmatpush1.msra.mxu0 0.0
        %520 = vmatprep.subr.mxu0 0.0
        %521 = vmatpush1.msra.mxu0 0.0
        %522 = vmatprep.subr.mxu0 0.0
        %523 = vmatpush1.msra.mxu0 0.0
        %524 = vmatprep.subr.mxu0 0.0
        %525 = vmatpush1.msra.mxu0 %v496
        %526 = vmatprep.subr.mxu0 0.0
        %527 = vmatpush1.msra.mxu0 %v495
        %528 = vmatprep.subr.mxu0 0.0
        %529 = vmatpush1.msra.mxu0 %v494
        %530 = vmatprep.subr.mxu0 0.0
        %531 = vmatpush1.msra.mxu0 %v493
        %532 = vmatprep.subr.mxu0 0.0
        %533 = vmatpush2.msra.mxu0 0.0
        %534 = vmatprep.subr.mxu0 0.0
        %535 = vmatpush2.msra.mxu0 0.0
        %536 = vmatprep.subr.mxu0 0.0
        %537 = vmatpush2.msra.mxu0 0.0
        %538 = vmatprep.subr.mxu0 0.0
        %539 = vmatpush2.msra.mxu0 0.0
        %540 = vmatprep.subr.mxu0 0.0
        %541 = vmatpush2.msra.mxu0 0.0
        %542 = vmatprep.subr.mxu0 0.0
        %543 = vmatpush2.msra.mxu0 0.0
        %544 = vmatprep.subr.mxu0 0.0
        %545 = vmatpush2.msra.mxu0 0.0
        %546 = vmatprep.subr.mxu0 0.0
        %547 = vmatpush2.msra.mxu0 0.0
        %548 = vmatprep.subr.mxu0 0.0
        %549 = vmatpush2.msra.mxu0 0.0
        %550 = vmatprep.subr.mxu0 0.0
        %551 = vmatpush2.msra.mxu0 0.0
        %552 = vmatprep.subr.mxu0 0.0
        %553 = vmatpush2.msra.mxu0 0.0
        %554 = vmatprep.subr.mxu0 0.0
        %555 = vmatpush2.msra.mxu0 0.0
        %556 = vmatprep.subr.mxu0 0.0
        %557 = vmatpush2.msra.mxu0 0.0
        %558 = vmatprep.subr.mxu0 0.0
        %559 = vmatpush2.msra.mxu0 0.0
        %560 = vmatprep.subr.mxu0 0.0
        %561 = vmatpush2.msra.mxu0 0.0
        %562 = vmatprep.subr.mxu0 0.0
        %563 = vmatpush2.msra.mxu0 0.0
        %564 = vmatprep.mubr.f32.mxu0 0.0
        %565 = vmatmul.mubr.f32.gmra.mxu0 %v498
        %v566 = vpop.f32.mrf.mxu0
        %v567 = vadd.f32 0.0, %v566
        %v568 = vpop.f32.mrf.mxu0
        %569 = vdwg.mxu0
        %vm570 = vcmask 516096
        %v571 = vsel %vm570, %v567, 0.0
        %572 = vadd.xlane.f32.xlu0 %v571
        %v573 = vpop.xlane.xlu0 %572
        %v574 = vrcp.pop 64.0
        %v575 = vmul.f32 %v573, %v574
        %v576 = vsub.f32 %v567, %v575
        %v577 = vmul.f32 %v576, %v576
        %v578 = vsel %vm570, %v577, 0.0
        %579 = vadd.xlane.f32.xlu0 %v578
        %v580 = vpop.xlane.xlu0 %579
        %v581 = vmul.f32 %v580, %v574
        %v582 = vadd.f32 %v581, 1e-05
        %v583 = vrsqrt.pop %v582
        %v584 = vmul.f32 %v576, %v583
        %v585 = vmul.f32 %v584, %v308
        %v587 = vrot.slane %v308, 1
        %v589 = vadd.f32 %v585, %v587
        %v590 = vmax.f32 %v589, 0.0
        %v591 = vld [vmem:[%s4] sm:$0xff]
        %v592 = vld [vmem:[%s4 + $0x8] sm:$0xff]
        %v593 = vld [vmem:[%s4 + $0x10] sm:$0xff]
        %v594 = vld [vmem:[%s4 + $0x18] sm:$0xff]
        %v595 = vld [vmem:[%s4 + $0x20] sm:$0xff]
        %v596 = vld [vmem:[%s4 + $0x28] sm:$0xff]
        %v597 = vld [vmem:[%s4 + $0x30] sm:$0xff]
        %v598 = vld [vmem:[%s4 + $0x38] sm:$0xff]
        %vm599 = vcmask 523264
        %v601 = vsel %vm599, %v590, 0
        %603 = vmatprep.subr.mxu0 0.0
        %604 = vmatpush1.msra.mxu0 0.0
        %605 = vmatprep.subr.mxu0 0.0
        %606 = vmatpush1.msra.mxu0 0.0
        %607 = vmatprep.subr.mxu0 0.0
        %608 = vmatpush1.msra.mxu0 0.0
        %609 = vmatprep.subr.mxu0 0.0
        %610 = vmatpush1.msra.mxu0 0.0
        %611 = vmatprep.subr.mxu0 0.0
        %612 = vmatpush1.msra.mxu0 0.0
        %613 = vmatprep.subr.mxu0 0.0
        %614 = vmatpush1.msra.mxu0 0.0
        %615 = vmatprep.subr.mxu0 0.0
        %616 = vmatpush1.msra.mxu0 0.0
        %617 = vmatprep.subr.mxu0 0.0
        %618 = vmatpush1.msra.mxu0 0.0
        %619 = vmatprep.subr.mxu0 0.0
        %620 = vmatpush1.msra.mxu0 %v598
        %621 = vmatprep.subr.mxu0 0.0
        %622 = vmatpush1.msra.mxu0 %v597
        %623 = vmatprep.subr.mxu0 0.0
        %624 = vmatpush1.msra.mxu0 %v596
        %625 = vmatprep.subr.mxu0 0.0
        %626 = vmatpush1.msra.mxu0 %v595
        %627 = vmatprep.subr.mxu0 0.0
        %628 = vmatpush1.msra.mxu0 %v594
        %629 = vmatprep.subr.mxu0 0.0
        %630 = vmatpush1.msra.mxu0 %v593
        %631 = vmatprep.subr.mxu0 0.0
        %632 = vmatpush1.msra.mxu0 %v592
        %633 = vmatprep.subr.mxu0 0.0
        %634 = vmatpush1.msra.mxu0 %v591
        %635 = vmatprep.subr.mxu0 0.0
        %636 = vmatpush2.msra.mxu0 0.0
        %637 = vmatprep.subr.mxu0 0.0
        %638 = vmatpush2.msra.mxu0 0.0
        %639 = vmatprep.subr.mxu0 0.0
        %640 = vmatpush2.msra.mxu0 0.0
        %641 = vmatprep.subr.mxu0 0.0
        %642 = vmatpush2.msra.mxu0 0.0
        %643 = vmatprep.subr.mxu0 0.0
        %644 = vmatpush2.msra.mxu0 0.0
        %645 = vmatprep.subr.mxu0 0.0
        %646 = vmatpush2.msra.mxu0 0.0
        %647 = vmatprep.subr.mxu0 0.0
        %648 = vmatpush2.msra.mxu0 0.0
        %649 = vmatprep.subr.mxu0 0.0
        %650 = vmatpush2.msra.mxu0 0.0
        %651 = vmatprep.subr.mxu0 0.0
        %652 = vmatpush2.msra.mxu0 0.0
        %653 = vmatprep.subr.mxu0 0.0
        %654 = vmatpush2.msra.mxu0 0.0
        %655 = vmatprep.subr.mxu0 0.0
        %656 = vmatpush2.msra.mxu0 0.0
        %657 = vmatprep.subr.mxu0 0.0
        %658 = vmatpush2.msra.mxu0 0.0
        %659 = vmatprep.subr.mxu0 0.0
        %660 = vmatpush2.msra.mxu0 0.0
        %661 = vmatprep.subr.mxu0 0.0
        %662 = vmatpush2.msra.mxu0 0.0
        %663 = vmatprep.subr.mxu0 0.0
        %664 = vmatpush2.msra.mxu0 0.0
        %665 = vmatprep.subr.mxu0 0.0
        %666 = vmatpush2.msra.mxu0 0.0
        %667 = vmatprep.mubr.f32.mxu0 0.0
        %668 = vmatmul.mubr.f32.gmra.mxu0 %v601
        %v669 = vpop.f32.mrf.mxu0
        %v670 = vadd.f32 0.0, %v669
        %v671 = vpop.f32.mrf.mxu0
        %672 = vdwg.mxu0
        %v673 = vsel %vm472, %v670, 0.0
        %674 = vadd.xlane.f32.xlu0 %v673
        %v675 = vpop.xlane.xlu0 %674
        %v676 = vmul.f32 %v675, %v476
        %v677 = vsub.f32 %v670, %v676
        %v678 = vmul.f32 %v677, %v677
        %v679 = vsel %vm472, %v678, 0.0
        %680 = vadd.xlane.f32.xlu0 %v679
        %v681 = vpop.xlane.xlu0 %680
        %v682 = vmul.f32 %v681, %v476
        %v683 = vadd.f32 %v682, 1e-05
        %v684 = vrsqrt.pop %v683
        %v685 = vmul.f32 %v677, %v684
        %v686 = vrot.slane %v307, 2
        %v688 = vmul.f32 %v685, %v686
        %v689 = vrot.slane %v307, 3
        %v691 = vadd.f32 %v688, %v689
        %v692 = vmax.f32 %v691, 0.0
        %v693 = vsel %vm472, %v692, 0.0
        %694 = vadd.xlane.f32.xlu0 %v693
        %v695 = vpop.xlane.xlu0 %694
        %v696 = vmul.f32 %v695, %v476
        %v697 = vsub.f32 %v692, %v696
        %v698 = vmul.f32 %v697, %v697
        %v699 = vsel %vm472, %v698, 0.0
        %700 = vadd.xlane.f32.xlu0 %v699
        %v701 = vpop.xlane.xlu0 %700
        %v702 = vmul.f32 %v701, %v476
        %v703 = vadd.f32 %v702, 1e-05
        %v704 = vrsqrt.pop %v703
        %v705 = vmul.f32 %v697, %v704
        %v706 = vrot.slane %v307, 4
        %v708 = vmul.f32 %v705, %v706
        %v709 = vrot.slane %v307, 5
        %v711 = vadd.f32 %v708, %v709
        %v712 = vadd.f32 %v692, %v711
        %v713 = vlaneseq
        %v714 = vshrl.u32 %v713, 7
        %v715 = vsub.s32 0, %v714
        %v716 = vrot.slane %v712, %v715
        %717 = vst.msk [vmem:[%s306] sm:$0xff] %vm310, %v716
        %s718 = sand.u32 %s185, 1
        %s719 = scalar_lea.sflag [#allocation4], %s718
        %s720 = sand.u32 %s185, 1
        %s721 = smul.addr %s720, 8
        %s722 = scalar_lea.vmem [#allocation7], %s721
        // Predicated region
        $region57: #{tpu_custom_call.1} parent=47 // pred_check
          %p723 = pneg %p195
        $region58: #{tpu_custom_call.1} parent=47 // pred_check_branch
          %725 = sbr.rel (%p723) target = $region60
        $region59: #{tpu_custom_call.1} parent=47 // pred_region
          %s727 = ssub.s32 128, 128
          %728 = vsyncadd %s719, %s727
          %s729 = smul.addr %s25, 128
          %s730 = scalar_lea.hbm %s7, %s729
          %s732 = sshll.u32 %s722, 4
          %s733 = int_to_ptr.vmem [resolvable:$true] %s732
          %735 = dma.vmem_to_hbm [thread:$0]  %s733, 128, %s730, %s719
        $region60: #{tpu_custom_call.1} parent=47 // pred_fallthru
          _
      $region48: #{tpu_custom_call.1} parent=5 // pred_fallthru
        _
      %p736 = scmp.le.s32.totalorder 2, %s20
      // Predicated region
      $region61: #{tpu_custom_call.1} parent=5 // pred_check
        %p737 = pneg %p736
      $region62: #{tpu_custom_call.1} parent=5 // pred_check_branch
        %739 = sbr.rel (%p737) target = $region64
      $region63: #{tpu_custom_call.1} parent=5 // pred_region
        %s740 = ssub.s32 %s20, 2
        // Predicated region
        $region65: #{tpu_custom_call.1} parent=63 // pred_check
          %p741 = pneg %p201
        $region66: #{tpu_custom_call.1} parent=63 // pred_check_branch
          %743 = sbr.rel (%p741) target = $region68
        $region67: #{tpu_custom_call.1} parent=63 // pred_region
          %s744 = sand.u32 %s186, 1
          %s745 = scalar_lea.sflag [#allocation4], %s744
          %s746 = sand.u32 %s186, 1
          %s747 = smul.addr %s746, 8
          %s748 = scalar_lea.vmem [#allocation7], %s747
          %749 = dma.done %s745, 128
        $region68: #{tpu_custom_call.1} parent=63 // pred_fallthru
          _
      $region64: #{tpu_custom_call.1} parent=5 // pred_fallthru
        _
    $region6: #{tpu_custom_call.1} parent=1 // loop_footer
      %s24 = sadd.s32 1, %s20
    $region7: #{tpu_custom_call.1} parent=1 // loop_footer_branch
      %19 = sbr.rel target = $region3
    $region8: #{tpu_custom_call.1} parent=1 // loop_exit
      _
    %750 = vsyncpa [#allocation3], 1
    %s751 = scalar_lea.sflag [#allocation3], 1
    %752 = vsyncpa %s751, 1
    %753 = vsyncpa [#allocation6], 1
    %754 = vsyncpa [#allocation4], 1
    %s755 = scalar_lea.sflag [#allocation4], 1
    %756 = vsyncpa %s755, 1

</llo_original>
